<compile_context>
chip_gen: v6e
topology: v6e:2x2x1
jax: 0.10.0
libtpu: 0.0.40
codegen_flags: <defaults>
</compile_context>

<pallas_src>
import functools
import math

import jax
import jax.numpy as jnp
from jax.experimental import pallas as pl
from jax.experimental.pallas import tpu as pltpu

LANE = 128


# ------------------------------ helpers ------------------------------------ #

def _mm(a, b):
    # MXU matmul: bf16 inputs, f32 accumulation.  astype is a no-op for
    # operands already stored in bf16 (adjacency, weights).
    return jnp.dot(a.astype(jnp.bfloat16), b.astype(jnp.bfloat16),
                   preferred_element_type=jnp.float32)


def _branch_spec(shape):
    # One branch (leading axis) per grid step; trailing dims are full-extent.
    nz = len(shape) - 1
    return pl.BlockSpec((1,) + tuple(shape[1:]),
                        lambda b, _nz=nz: (b,) + (0,) * _nz)


def _shared_spec(shape):
    # Whole-array block, identical for every grid step.
    nd = len(shape)
    return pl.BlockSpec(tuple(shape), lambda b, _nd=nd: (0,) * _nd)


# ----------------------- fused forward kernel ------------------------------ #

def _fused_forward_kernel(*refs, n_sage, n_fcn):
    # refs layout:
    #   feats2, blocks2, w0, b0, (ws, wn, b) * n_sage,        # branch-stacked GCN
    #   wa, wb, b1, (w, b) * (n_fcn - 1),                     # fused MLP heads
    #   out_ref, h_scratch
    idx = 0
    feats_ref = refs[idx]; idx += 1
    blocks_ref = refs[idx]; idx += 1
    w0_ref = refs[idx]; idx += 1
    b0_ref = refs[idx]; idx += 1
    sage_refs = []
    for _ in range(n_sage):
        sage_refs.append((refs[idx], refs[idx + 1], refs[idx + 2]))
        idx += 3
    wa_ref, wb_ref, b1_ref = refs[idx], refs[idx + 1], refs[idx + 2]; idx += 3
    rest_refs = []
    for _ in range(n_fcn - 1):
        rest_refs.append((refs[idx], refs[idx + 1]))
        idx += 2
    out_ref = refs[idx]; idx += 1
    h_scratch = refs[idx]

    b = pl.program_id(0)

    # ---------------- GCN branch b: fc_init + SAGEConv stack ----------------
    # h = relu(features @ W0 + b0)
    h = jnp.maximum(_mm(feats_ref[0], w0_ref[0]) + b0_ref[0], 0.0)

    # SAGEConv (mean aggregator, 'sum' combine):
    #   out = H @ W_self + (A_rownorm @ H) @ W_neigh + b
    # dropout between layers is identity at inference.
    for l, (ws_ref, wn_ref, bl_ref) in enumerate(sage_refs):
        a = blocks_ref[0, l]                         # [N, N] bf16, row-normalized
        wn = wn_ref[0]
        k_in, k_out = wn.shape
        if k_out <= k_in:
            agg = _mm(a, _mm(h, wn))                 # A @ (H @ Wn): cheaper big matmul
        else:
            agg = _mm(_mm(a, h), wn)
        y = _mm(h, ws_ref[0]) + agg + bl_ref[0]
        if l < n_sage - 1:                           # relu on all but the last layer
            y = jnp.maximum(y, 0.0)
        h = y

    # Park branch-0 (GCN1) output in VMEM scratch; branch-1 output stays live.
    @pl.when(b == 0)
    def _():
        h_scratch[...] = h.astype(h_scratch.dtype)

    # ------------- MLP heads (label + position fused) on last step ----------
    @pl.when(b == pl.num_programs(0) - 1)
    def _():
        h0 = h_scratch[...]                          # GCN1 output [N, D] (bf16)
        h1 = h                                       # GCN2 output [N, D] (f32)
        if n_fcn >= 2:
            # dropout (identity) + ReLU applied to concat(h0, h1) before linear_1.
            h0 = jnp.maximum(h0, 0.0)
            h1 = jnp.maximum(h1, 0.0)
        # concat folded into linear_1: cat(h0,h1) @ W1 == h0 @ W1[:D] + h1 @ W1[D:]
        x = _mm(h0, wa_ref[...]) + _mm(h1, wb_ref[...]) + b1_ref[...]
        for j, (w_ref, bb_ref) in enumerate(rest_refs):
            if j < n_fcn - 2:                        # ReLU before linear_2..linear_{n_fcn-1}
                x = jnp.maximum(x, 0.0)
            x = _mm(x, w_ref[...]) + bb_ref[...]     # block-diag fused label/position
        out_ref[...] = x.astype(out_ref.dtype)       # lane-dense [N, 128] slab


def fused_forward(params, feats2, blocks2):
    gcn = params["gcn"]
    head = params["head"]
    n_sage = len(gcn["layers"])
    n_fcn = 1 + len(head["rest"])
    B, N, _ = feats2.shape

    args = [feats2, blocks2, gcn["w0"], gcn["b0"]]
    for lp in gcn["layers"]:
        args += [lp["ws"], lp["wn"], lp["b"]]
    n_branch_args = len(args)
    args += [head["wa"], head["wb"], head["b1"]]
    for lp in head["rest"]:
        args += [lp["w"], lp["b"]]

    in_specs = ([_branch_spec(a.shape) for a in args[:n_branch_args]] +
                [_shared_spec(a.shape) for a in args[n_branch_args:]])

    out_cols = (head["rest"][-1]["w"].shape[1] if head["rest"]
                else head["wa"].shape[1])
    d_gcn = gcn["layers"][-1]["ws"].shape[2]

    return pl.pallas_call(
        functools.partial(_fused_forward_kernel, n_sage=n_sage, n_fcn=n_fcn),
        grid=(B,),
        in_specs=in_specs,
        out_specs=pl.BlockSpec((N, out_cols), lambda b: (0, 0)),
        out_shape=jax.ShapeDtypeStruct((N, out_cols), jnp.float32),
        scratch_shapes=[pltpu.VMEM((N, d_gcn), jnp.bfloat16)],
        compiler_params=pltpu.CompilerParams(
            # scratch carries h across branches and the heads need both ->
            # the branch axis must run sequentially on one core.
            dimension_semantics=("arbitrary",),
            vmem_limit_bytes=32 * 1024 * 1024),      # explicit: safe on v7x (64 MiB)
    )(*args)


# ----------------------------- parameter init ------------------------------ #

def _init_linear(key, fan_in, fan_out):
    # torch.nn.Linear default init; bias stored as (1, O).
    kw, kb = jax.random.split(key)
    bound = 1.0 / math.sqrt(fan_in)
    w = jax.random.uniform(kw, (fan_in, fan_out), jnp.float32, -bound, bound)
    b = jax.random.uniform(kb, (1, fan_out), jnp.float32, -bound, bound)
    return w, b


def init_gcn_params(key, in_dim, hidden_dim, out_dim, n_layers):
    # TODO(synk): GCN1/GCN2 are external modules in the PyTorch spec; this uses
    #             a GraphSAGE-style GCN (fc_init + SAGEConv(mean) layers).
    n_sage = n_layers + 1
    keys = jax.random.split(key, 1 + 3 * n_sage)
    w0, b0 = _init_linear(keys[0], in_dim, hidden_dim)
    layers = []
    d_in = hidden_dim
    dims = [hidden_dim] * n_layers + [out_dim]
    k = 1
    for d_out in dims:
        ws, _ = _init_linear(keys[k], d_in, d_out)
        wn, _ = _init_linear(keys[k + 1], d_in, d_out)
        _, bb = _init_linear(keys[k + 2], d_in, d_out)
        layers.append({"ws": ws, "wn": wn, "b": bb})
        d_in = d_out
        k += 3
    return {"w0": w0, "b0": b0, "layers": layers}


def init_mlp_params(key, in_dim, head_out, n_fcn):
    keys = jax.random.split(key, n_fcn)
    layers = []
    d = in_dim
    for i in range(n_fcn - 1):
        w, b = _init_linear(keys[i], d, d // 2)
        layers.append({"w": w, "b": b})
        d = d // 2
    w, b = _init_linear(keys[-1], d, head_out)
    layers.append({"w": w, "b": b})
    return layers


def _block_diag(wl, wp):
    zl = jnp.zeros((wl.shape[0], wp.shape[1]), wl.dtype)
    zp = jnp.zeros((wp.shape[0], wl.shape[1]), wl.dtype)
    return jnp.concatenate(
        [jnp.concatenate([wl, zl], axis=1),
         jnp.concatenate([zp, wp], axis=1)], axis=0)


def prepare_params(gcn1, gcn2, mlp_label, mlp_position, gcn_out):
    """One-time packing: stack GCN branches, bf16-cast MXU weights, fuse the
    label/position heads, pad the final head output to a lane-dense 128 cols."""
    f16 = lambda x: x.astype(jnp.bfloat16)

    # Stack the two GCN branches on a leading axis (branch == grid step).
    stacked = jax.tree_util.tree_map(lambda a, b: jnp.stack([a, b]), gcn1, gcn2)
    gcn = {
        "w0": f16(stacked["w0"]),
        "b0": stacked["b0"],                          # biases stay f32
        "layers": [{"ws": f16(l["ws"]), "wn": f16(l["wn"]), "b": l["b"]}
                   for l in stacked["layers"]],
    }

    # Fuse label & position heads layer-by-layer:
    #   layer 1 : both heads see the same input -> horizontal weight concat
    #   layer j>1: inputs are disjoint           -> block-diagonal weights
    n_fcn = len(mlp_label)
    fused = []
    for j in range(n_fcn):
        wl, bl = mlp_label[j]["w"], mlp_label[j]["b"]
        wp, bp = mlp_position[j]["w"], mlp_position[j]["b"]
        w = jnp.concatenate([wl, wp], axis=1) if j == 0 else _block_diag(wl, wp)
        fused.append({"w": w, "b": jnp.concatenate([bl, bp], axis=1)})

    # Lane-dense output: zero-pad the last fused layer to a multiple of 128.
    out_real = fused[-1]["w"].shape[1]
    out_pad = max(LANE, ((out_real + LANE - 1) // LANE) * LANE)
    pad = out_pad - out_real
    fused[-1]["w"] = jnp.pad(fused[-1]["w"], ((0, 0), (0, pad)))
    fused[-1]["b"] = jnp.pad(fused[-1]["b"], ((0, 0), (0, pad)))

    # Split the first fused layer row-wise so concat(h, rh) never materializes.
    w1 = fused[0]["w"]
    head = {
        "wa": f16(w1[:gcn_out]),                      # multiplies GCN1 output
        "wb": f16(w1[gcn_out:]),                      # multiplies GCN2 output
        "b1": fused[0]["b"],
        "rest": [{"w": f16(l["w"]), "b": l["b"]} for l in fused[1:]],
    }
    return {"gcn": gcn, "head": head}


# -------------------------------- forward ---------------------------------- #

@functools.partial(jax.jit, static_argnames=("out_dim",))
def biclassifier_pos_forward(params, feats2, blocks2, *, out_dim):
    fused = fused_forward(params, feats2, blocks2)    # [N, 128] lane-dense slab
    label = fused[:, :out_dim]
    if out_dim == 1:                                  # torch .squeeze(-1)
        label = label[:, 0]
    position = fused[:, out_dim]                      # [N]
    return label, position


# ---------------------------------- main ------------------------------------ #

if __name__ == "__main__":
    key = jax.random.PRNGKey(0)
    k_if, k_of, k_ia, k_oa, k_par = jax.random.split(key, 5)

    N = 16            # number of nodes
    in_dim = 8        # raw node feature dim
    gcn_hidden = 32
    gcn_out = 16      # == GCN.out_dim; combined hidden = 32 (concat)
    n_layers = 1      # -> 2 SAGE layers per GCN, 2 blocks per branch
    out_dim = 2       # label classes
    n_fcn = 2         # heads: (dropout, relu, linear 32->16), linear 16->out

    in_features = jax.random.normal(k_if, (N, in_dim), jnp.float32)
    out_features = jax.random.normal(k_of, (N, in_dim), jnp.float32)

    def make_blocks(k, n_blocks):
        ks = jax.random.split(k, n_blocks)
        blocks = []
        for kk in ks:
            a = (jax.random.uniform(kk, (N, N)) < 0.4).astype(jnp.float32)
            deg = jnp.maximum(a.sum(axis=1, keepdims=True), 1.0)
            blocks.append(a / deg)                    # row-normalized (mean agg)
        return jnp.stack(blocks)                      # [L, N, N]

    L = n_layers + 1
    in_blocks = make_blocks(k_ia, L)
    out_blocks = make_blocks(k_oa, L)

    # One-time data prep OUTSIDE the jitted forward: stack branches + bf16 cast
    # (no per-call HBM re-stack of the largest tensor).
    feats2 = jnp.stack([in_features, out_features]).astype(jnp.bfloat16)   # [2,N,in]
    blocks2 = jnp.stack([in_blocks, out_blocks]).astype(jnp.bfloat16)      # [2,L,N,N]

    k1, k2, k3, k4 = jax.random.split(k_par, 4)
    gcn1 = init_gcn_params(k1, in_dim, gcn_hidden, gcn_out, n_layers)
    gcn2 = init_gcn_params(k2, in_dim, gcn_hidden, gcn_out, n_layers)
    hidden_comb = 2 * gcn_out                         # combine_type == 'concat'
    mlp_label = init_mlp_params(k3, hidden_comb, out_dim, n_fcn)
    mlp_position = init_mlp_params(k4, hidden_comb, 1, n_fcn)
    params = prepare_params(gcn1, gcn2, mlp_label, mlp_position, gcn_out)

    label, position = biclassifier_pos_forward(params, feats2, blocks2,
                                               out_dim=out_dim)
    label, position = jax.block_until_ready((label, position))

    assert label.shape == (N, out_dim) and label.dtype == jnp.float32
    assert position.shape == (N,) and position.dtype == jnp.float32
    print("KERNEL_OK")
</pallas_src>

<mosaic_0001>
module attributes {stable_mosaic.version = 11 : i64} {
  func.func @_fused_forward_kernel(%arg0: i32, %arg1: memref<1x16x8xbf16, #tpu.memory_space<vmem>>, %arg2: memref<1x2x16x16xbf16, #tpu.memory_space<vmem>>, %arg3: memref<1x8x32xbf16, #tpu.memory_space<vmem>>, %arg4: memref<1x1x32xf32, #tpu.memory_space<vmem>>, %arg5: memref<1x32x32xbf16, #tpu.memory_space<vmem>>, %arg6: memref<1x32x32xbf16, #tpu.memory_space<vmem>>, %arg7: memref<1x1x32xf32, #tpu.memory_space<vmem>>, %arg8: memref<1x32x16xbf16, #tpu.memory_space<vmem>>, %arg9: memref<1x32x16xbf16, #tpu.memory_space<vmem>>, %arg10: memref<1x1x16xf32, #tpu.memory_space<vmem>>, %arg11: memref<16x32xbf16, #tpu.memory_space<vmem>>, %arg12: memref<16x32xbf16, #tpu.memory_space<vmem>>, %arg13: memref<1x32xf32, #tpu.memory_space<vmem>>, %arg14: memref<32x128xbf16, #tpu.memory_space<vmem>>, %arg15: memref<1x128xf32, #tpu.memory_space<vmem>>, %arg16: memref<16x128xf32, #tpu.memory_space<vmem>>, %arg17: memref<16x16xbf16, #tpu.memory_space<vmem>>) attributes {dimension_semantics = [#tpu.dimension_semantics<arbitrary>], iteration_bounds = array<i64: 2>, scalar_prefetch = 0 : i64, scratch_operands = 1 : i64, tpu.core_type = #tpu.core_type<tc>, window_params = [{transform_indices = @transform_0, window_bounds = array<i64: 1, 16, 8>}, {transform_indices = @transform_1, window_bounds = array<i64: 1, 2, 16, 16>}, {transform_indices = @transform_2, window_bounds = array<i64: 1, 8, 32>}, {transform_indices = @transform_3, window_bounds = array<i64: 1, 1, 32>}, {transform_indices = @transform_4, window_bounds = array<i64: 1, 32, 32>}, {transform_indices = @transform_5, window_bounds = array<i64: 1, 32, 32>}, {transform_indices = @transform_6, window_bounds = array<i64: 1, 1, 32>}, {transform_indices = @transform_7, window_bounds = array<i64: 1, 32, 16>}, {transform_indices = @transform_8, window_bounds = array<i64: 1, 32, 16>}, {transform_indices = @transform_9, window_bounds = array<i64: 1, 1, 16>}, {pipeline_mode = #tpu.pipeline_mode<synchronous>, transform_indices = @transform_10, window_bounds = array<i64: 16, 32>}, {pipeline_mode = #tpu.pipeline_mode<synchronous>, transform_indices = @transform_11, window_bounds = array<i64: 16, 32>}, {pipeline_mode = #tpu.pipeline_mode<synchronous>, transform_indices = @transform_12, window_bounds = array<i64: 1, 32>}, {pipeline_mode = #tpu.pipeline_mode<synchronous>, transform_indices = @transform_13, window_bounds = array<i64: 32, 128>}, {pipeline_mode = #tpu.pipeline_mode<synchronous>, transform_indices = @transform_14, window_bounds = array<i64: 1, 128>}, {pipeline_mode = #tpu.pipeline_mode<synchronous>, transform_indices = @transform_15, window_bounds = array<i64: 16, 128>}]} {
    %c0 = arith.constant 0 : index
    %c0_0 = arith.constant 0 : index
    %c0_1 = arith.constant 0 : index
    %0 = vector.load %arg1[%c0, %c0_0, %c0_1] : memref<1x16x8xbf16, #tpu.memory_space<vmem>>, vector<1x16x8xbf16>
    %1 = vector.shape_cast %0 : vector<1x16x8xbf16> to vector<16x8xbf16>
    %c0_2 = arith.constant 0 : index
    %c0_3 = arith.constant 0 : index
    %c0_4 = arith.constant 0 : index
    %2 = vector.load %arg3[%c0_2, %c0_3, %c0_4] : memref<1x8x32xbf16, #tpu.memory_space<vmem>>, vector<1x8x32xbf16>
    %3 = vector.shape_cast %2 : vector<1x8x32xbf16> to vector<8x32xbf16>
    %cst = arith.constant dense<0.000000e+00> : vector<16x32xf32>
    %4 = tpu.matmul %1, %3, %cst {dimension_numbers = #tpu.dot_dimension_numbers<[1], [0], [0], [1], [0, 0, 1, 1], [], []>} : vector<16x8xbf16>, vector<8x32xbf16>, vector<16x32xf32> -> vector<16x32xf32>
    %c0_5 = arith.constant 0 : index
    %c0_6 = arith.constant 0 : index
    %c0_7 = arith.constant 0 : index
    %5 = vector.load %arg4[%c0_5, %c0_6, %c0_7] : memref<1x1x32xf32, #tpu.memory_space<vmem>>, vector<1x1x32xf32>
    %6 = vector.shape_cast %5 : vector<1x1x32xf32> to vector<1x32xf32>
    %7 = vector.broadcast %6 : vector<1x32xf32> to vector<16x32xf32>
    %8 = arith.addf %4, %7 : vector<16x32xf32>
    %cst_8 = arith.constant 0.000000e+00 : f32
    %9 = vector.broadcast %cst_8 : f32 to vector<16x32xf32>
    %10 = arith.maximumf %8, %9 : vector<16x32xf32>
    %c0_9 = arith.constant 0 : index
    %c0_10 = arith.constant 0 : index
    %c0_11 = arith.constant 0 : index
    %c0_12 = arith.constant 0 : index
    %11 = vector.load %arg2[%c0_9, %c0_10, %c0_11, %c0_12] : memref<1x2x16x16xbf16, #tpu.memory_space<vmem>>, vector<1x1x16x16xbf16>
    %12 = vector.shape_cast %11 : vector<1x1x16x16xbf16> to vector<16x16xbf16>
    %c0_13 = arith.constant 0 : index
    %c0_14 = arith.constant 0 : index
    %c0_15 = arith.constant 0 : index
    %13 = vector.load %arg6[%c0_13, %c0_14, %c0_15] : memref<1x32x32xbf16, #tpu.memory_space<vmem>>, vector<1x32x32xbf16>
    %14 = vector.shape_cast %13 : vector<1x32x32xbf16> to vector<32x32xbf16>
    %15 = arith.truncf %10 : vector<16x32xf32> to vector<16x32xbf16>
    %cst_16 = arith.constant dense<0.000000e+00> : vector<16x32xf32>
    %16 = tpu.matmul %15, %14, %cst_16 {dimension_numbers = #tpu.dot_dimension_numbers<[1], [0], [0], [1], [0, 0, 1, 1], [], []>} : vector<16x32xbf16>, vector<32x32xbf16>, vector<16x32xf32> -> vector<16x32xf32>
    %17 = arith.truncf %16 : vector<16x32xf32> to vector<16x32xbf16>
    %cst_17 = arith.constant dense<0.000000e+00> : vector<16x32xf32>
    %18 = tpu.matmul %12, %17, %cst_17 {dimension_numbers = #tpu.dot_dimension_numbers<[1], [0], [0], [1], [0, 0, 1, 1], [], []>} : vector<16x16xbf16>, vector<16x32xbf16>, vector<16x32xf32> -> vector<16x32xf32>
    %c0_18 = arith.constant 0 : index
    %c0_19 = arith.constant 0 : index
    %c0_20 = arith.constant 0 : index
    %19 = vector.load %arg5[%c0_18, %c0_19, %c0_20] : memref<1x32x32xbf16, #tpu.memory_space<vmem>>, vector<1x32x32xbf16>
    %20 = vector.shape_cast %19 : vector<1x32x32xbf16> to vector<32x32xbf16>
    %21 = arith.truncf %10 : vector<16x32xf32> to vector<16x32xbf16>
    %cst_21 = arith.constant dense<0.000000e+00> : vector<16x32xf32>
    %22 = tpu.matmul %21, %20, %cst_21 {dimension_numbers = #tpu.dot_dimension_numbers<[1], [0], [0], [1], [0, 0, 1, 1], [], []>} : vector<16x32xbf16>, vector<32x32xbf16>, vector<16x32xf32> -> vector<16x32xf32>
    %23 = arith.addf %22, %18 : vector<16x32xf32>
    %c0_22 = arith.constant 0 : index
    %c0_23 = arith.constant 0 : index
    %c0_24 = arith.constant 0 : index
    %24 = vector.load %arg7[%c0_22, %c0_23, %c0_24] : memref<1x1x32xf32, #tpu.memory_space<vmem>>, vector<1x1x32xf32>
    %25 = vector.shape_cast %24 : vector<1x1x32xf32> to vector<1x32xf32>
    %26 = vector.broadcast %25 : vector<1x32xf32> to vector<16x32xf32>
    %27 = arith.addf %23, %26 : vector<16x32xf32>
    %cst_25 = arith.constant 0.000000e+00 : f32
    %28 = vector.broadcast %cst_25 : f32 to vector<16x32xf32>
    %29 = arith.maximumf %27, %28 : vector<16x32xf32>
    %c0_26 = arith.constant 0 : index
    %c1 = arith.constant 1 : index
    %c0_27 = arith.constant 0 : index
    %c0_28 = arith.constant 0 : index
    %30 = vector.load %arg2[%c0_26, %c1, %c0_27, %c0_28] : memref<1x2x16x16xbf16, #tpu.memory_space<vmem>>, vector<1x1x16x16xbf16>
    %31 = vector.shape_cast %30 : vector<1x1x16x16xbf16> to vector<16x16xbf16>
    %c0_29 = arith.constant 0 : index
    %c0_30 = arith.constant 0 : index
    %c0_31 = arith.constant 0 : index
    %32 = vector.load %arg9[%c0_29, %c0_30, %c0_31] : memref<1x32x16xbf16, #tpu.memory_space<vmem>>, vector<1x32x16xbf16>
    %33 = vector.shape_cast %32 : vector<1x32x16xbf16> to vector<32x16xbf16>
    %34 = arith.truncf %29 : vector<16x32xf32> to vector<16x32xbf16>
    %cst_32 = arith.constant dense<0.000000e+00> : vector<16x16xf32>
    %35 = tpu.matmul %34, %33, %cst_32 {dimension_numbers = #tpu.dot_dimension_numbers<[1], [0], [0], [1], [0, 0, 1, 1], [], []>} : vector<16x32xbf16>, vector<32x16xbf16>, vector<16x16xf32> -> vector<16x16xf32>
    %36 = arith.truncf %35 : vector<16x16xf32> to vector<16x16xbf16>
    %cst_33 = arith.constant dense<0.000000e+00> : vector<16x16xf32>
    %37 = tpu.matmul %31, %36, %cst_33 {dimension_numbers = #tpu.dot_dimension_numbers<[1], [0], [0], [1], [0, 0, 1, 1], [], []>} : vector<16x16xbf16>, vector<16x16xbf16>, vector<16x16xf32> -> vector<16x16xf32>
    %c0_34 = arith.constant 0 : index
    %c0_35 = arith.constant 0 : index
    %c0_36 = arith.constant 0 : index
    %38 = vector.load %arg8[%c0_34, %c0_35, %c0_36] : memref<1x32x16xbf16, #tpu.memory_space<vmem>>, vector<1x32x16xbf16>
    %39 = vector.shape_cast %38 : vector<1x32x16xbf16> to vector<32x16xbf16>
    %40 = arith.truncf %29 : vector<16x32xf32> to vector<16x32xbf16>
    %cst_37 = arith.constant dense<0.000000e+00> : vector<16x16xf32>
    %41 = tpu.matmul %40, %39, %cst_37 {dimension_numbers = #tpu.dot_dimension_numbers<[1], [0], [0], [1], [0, 0, 1, 1], [], []>} : vector<16x32xbf16>, vector<32x16xbf16>, vector<16x16xf32> -> vector<16x16xf32>
    %42 = arith.addf %41, %37 : vector<16x16xf32>
    %c0_38 = arith.constant 0 : index
    %c0_39 = arith.constant 0 : index
    %c0_40 = arith.constant 0 : index
    %43 = vector.load %arg10[%c0_38, %c0_39, %c0_40] : memref<1x1x16xf32, #tpu.memory_space<vmem>>, vector<1x1x16xf32>
    %44 = vector.shape_cast %43 : vector<1x1x16xf32> to vector<1x16xf32>
    %45 = vector.broadcast %44 : vector<1x16xf32> to vector<16x16xf32>
    %46 = arith.addf %42, %45 : vector<16x16xf32>
    %c0_i32 = arith.constant 0 : i32
    %47 = arith.cmpi eq, %arg0, %c0_i32 : i32
    %48 = arith.extui %47 : i1 to i32
    %c0_i32_41 = arith.constant 0 : i32
    %49 = arith.cmpi ne, %48, %c0_i32_41 : i32
    scf.if %49 {
      %53 = arith.truncf %46 : vector<16x16xf32> to vector<16x16xbf16>
      %c0_43 = arith.constant 0 : index
      %c0_44 = arith.constant 0 : index
      %54 = vector.load %arg17[%c0_43, %c0_44] : memref<16x16xbf16, #tpu.memory_space<vmem>>, vector<16x16xbf16>
      tpu.vector_store %arg17[%c0_43, %c0_44], %53 {strides = array<i32>} : memref<16x16xbf16, #tpu.memory_space<vmem>>, vector<16x16xbf16>,
    } else {
    }
    %c1_i32 = arith.constant 1 : i32
    %50 = arith.cmpi eq, %arg0, %c1_i32 : i32
    %51 = arith.extui %50 : i1 to i32
    %c0_i32_42 = arith.constant 0 : i32
    %52 = arith.cmpi ne, %51, %c0_i32_42 : i32
    scf.if %52 {
      %c0_43 = arith.constant 0 : index
      %c0_44 = arith.constant 0 : index
      %53 = vector.load %arg17[%c0_43, %c0_44] : memref<16x16xbf16, #tpu.memory_space<vmem>>, vector<16x16xbf16>
      %cst_45 = arith.constant 0.000000e+00 : bf16
      %54 = vector.broadcast %cst_45 : bf16 to vector<16x16xbf16>
      %55 = arith.maximumf %53, %54 : vector<16x16xbf16>
      %cst_46 = arith.constant 0.000000e+00 : f32
      %56 = vector.broadcast %cst_46 : f32 to vector<16x16xf32>
      %57 = arith.maximumf %46, %56 : vector<16x16xf32>
      %c0_47 = arith.constant 0 : index
      %c0_48 = arith.constant 0 : index
      %58 = vector.load %arg11[%c0_47, %c0_48] : memref<16x32xbf16, #tpu.memory_space<vmem>>, vector<16x32xbf16>
      %cst_49 = arith.constant dense<0.000000e+00> : vector<16x32xf32>
      %59 = tpu.matmul %55, %58, %cst_49 {dimension_numbers = #tpu.dot_dimension_numbers<[1], [0], [0], [1], [0, 0, 1, 1], [], []>} : vector<16x16xbf16>, vector<16x32xbf16>, vector<16x32xf32> -> vector<16x32xf32>
      %c0_50 = arith.constant 0 : index
      %c0_51 = arith.constant 0 : index
      %60 = vector.load %arg12[%c0_50, %c0_51] : memref<16x32xbf16, #tpu.memory_space<vmem>>, vector<16x32xbf16>
      %61 = arith.truncf %57 : vector<16x16xf32> to vector<16x16xbf16>
      %cst_52 = arith.constant dense<0.000000e+00> : vector<16x32xf32>
      %62 = tpu.matmul %61, %60, %cst_52 {dimension_numbers = #tpu.dot_dimension_numbers<[1], [0], [0], [1], [0, 0, 1, 1], [], []>} : vector<16x16xbf16>, vector<16x32xbf16>, vector<16x32xf32> -> vector<16x32xf32>
      %63 = arith.addf %59, %62 : vector<16x32xf32>
      %c0_53 = arith.constant 0 : index
      %c0_54 = arith.constant 0 : index
      %64 = vector.load %arg13[%c0_53, %c0_54] : memref<1x32xf32, #tpu.memory_space<vmem>>, vector<1x32xf32>
      %65 = vector.broadcast %64 : vector<1x32xf32> to vector<16x32xf32>
      %66 = arith.addf %63, %65 : vector<16x32xf32>
      %c0_55 = arith.constant 0 : index
      %c0_56 = arith.constant 0 : index
      %67 = vector.load %arg14[%c0_55, %c0_56] : memref<32x128xbf16, #tpu.memory_space<vmem>>, vector<32x128xbf16>
      %68 = arith.truncf %66 : vector<16x32xf32> to vector<16x32xbf16>
      %cst_57 = arith.constant dense<0.000000e+00> : vector<16x128xf32>
      %69 = tpu.matmul %68, %67, %cst_57 {dimension_numbers = #tpu.dot_dimension_numbers<[1], [0], [0], [1], [0, 0, 1, 1], [], []>} : vector<16x32xbf16>, vector<32x128xbf16>, vector<16x128xf32> -> vector<16x128xf32>
      %c0_58 = arith.constant 0 : index
      %c0_59 = arith.constant 0 : index
      %70 = vector.load %arg15[%c0_58, %c0_59] : memref<1x128xf32, #tpu.memory_space<vmem>>, vector<1x128xf32>
      %71 = vector.broadcast %70 : vector<1x128xf32> to vector<16x128xf32>
      %72 = arith.addf %69, %71 : vector<16x128xf32>
      %c0_60 = arith.constant 0 : index
      %c0_61 = arith.constant 0 : index
      %73 = vector.load %arg16[%c0_60, %c0_61] : memref<16x128xf32, #tpu.memory_space<vmem>>, vector<16x128xf32>
      tpu.vector_store %arg16[%c0_60, %c0_61], %72 {strides = array<i32>} : memref<16x128xf32, #tpu.memory_space<vmem>>, vector<16x128xf32>,
    } else {
    }
    return
  }
  func.func @transform_0(%arg0: i32) -> (i32, i32, i32) {
    %c0_i32 = arith.constant 0 : i32
    %c0_i32_0 = arith.constant 0 : i32
    %c0_i32_1 = arith.constant 0 : i32
    return %arg0, %c0_i32, %c0_i32_0 : i32, i32, i32
  }
  func.func @transform_1(%arg0: i32) -> (i32, i32, i32, i32) {
    %c0_i32 = arith.constant 0 : i32
    %c0_i32_0 = arith.constant 0 : i32
    %c0_i32_1 = arith.constant 0 : i32
    %c0_i32_2 = arith.constant 0 : i32
    return %arg0, %c0_i32, %c0_i32_0, %c0_i32_1 : i32, i32, i32, i32
  }
  func.func @transform_2(%arg0: i32) -> (i32, i32, i32) {
    %c0_i32 = arith.constant 0 : i32
    %c0_i32_0 = arith.constant 0 : i32
    %c0_i32_1 = arith.constant 0 : i32
    return %arg0, %c0_i32, %c0_i32_0 : i32, i32, i32
  }
  func.func @transform_3(%arg0: i32) -> (i32, i32, i32) {
    %c0_i32 = arith.constant 0 : i32
    %c0_i32_0 = arith.constant 0 : i32
    %c0_i32_1 = arith.constant 0 : i32
    return %arg0, %c0_i32, %c0_i32_0 : i32, i32, i32
  }
  func.func @transform_4(%arg0: i32) -> (i32, i32, i32) {
    %c0_i32 = arith.constant 0 : i32
    %c0_i32_0 = arith.constant 0 : i32
    %c0_i32_1 = arith.constant 0 : i32
    return %arg0, %c0_i32, %c0_i32_0 : i32, i32, i32
  }
  func.func @transform_5(%arg0: i32) -> (i32, i32, i32) {
    %c0_i32 = arith.constant 0 : i32
    %c0_i32_0 = arith.constant 0 : i32
    %c0_i32_1 = arith.constant 0 : i32
    return %arg0, %c0_i32, %c0_i32_0 : i32, i32, i32
  }
  func.func @transform_6(%arg0: i32) -> (i32, i32, i32) {
    %c0_i32 = arith.constant 0 : i32
    %c0_i32_0 = arith.constant 0 : i32
    %c0_i32_1 = arith.constant 0 : i32
    return %arg0, %c0_i32, %c0_i32_0 : i32, i32, i32
  }
  func.func @transform_7(%arg0: i32) -> (i32, i32, i32) {
    %c0_i32 = arith.constant 0 : i32
    %c0_i32_0 = arith.constant 0 : i32
    %c0_i32_1 = arith.constant 0 : i32
    return %arg0, %c0_i32, %c0_i32_0 : i32, i32, i32
  }
  func.func @transform_8(%arg0: i32) -> (i32, i32, i32) {
    %c0_i32 = arith.constant 0 : i32
    %c0_i32_0 = arith.constant 0 : i32
    %c0_i32_1 = arith.constant 0 : i32
    return %arg0, %c0_i32, %c0_i32_0 : i32, i32, i32
  }
  func.func @transform_9(%arg0: i32) -> (i32, i32, i32) {
    %c0_i32 = arith.constant 0 : i32
    %c0_i32_0 = arith.constant 0 : i32
    %c0_i32_1 = arith.constant 0 : i32
    return %arg0, %c0_i32, %c0_i32_0 : i32, i32, i32
  }
  func.func @transform_10(%arg0: i32) -> (i32, i32) {
    %c0_i32 = arith.constant 0 : i32
    %c0_i32_0 = arith.constant 0 : i32
    %c0_i32_1 = arith.constant 0 : i32
    return %c0_i32, %c0_i32_0 : i32, i32
  }
  func.func @transform_11(%arg0: i32) -> (i32, i32) {
    %c0_i32 = arith.constant 0 : i32
    %c0_i32_0 = arith.constant 0 : i32
    %c0_i32_1 = arith.constant 0 : i32
    return %c0_i32, %c0_i32_0 : i32, i32
  }
  func.func @transform_12(%arg0: i32) -> (i32, i32) {
    %c0_i32 = arith.constant 0 : i32
    %c0_i32_0 = arith.constant 0 : i32
    %c0_i32_1 = arith.constant 0 : i32
    return %c0_i32, %c0_i32_0 : i32, i32
  }
  func.func @transform_13(%arg0: i32) -> (i32, i32) {
    %c0_i32 = arith.constant 0 : i32
    %c0_i32_0 = arith.constant 0 : i32
    %c0_i32_1 = arith.constant 0 : i32
    return %c0_i32, %c0_i32_0 : i32, i32
  }
  func.func @transform_14(%arg0: i32) -> (i32, i32) {
    %c0_i32 = arith.constant 0 : i32
    %c0_i32_0 = arith.constant 0 : i32
    %c0_i32_1 = arith.constant 0 : i32
    return %c0_i32, %c0_i32_0 : i32, i32
  }
  func.func @transform_15(%arg0: i32) -> (i32, i32) {
    %c0_i32 = arith.constant 0 : i32
    %c0_i32_0 = arith.constant 0 : i32
    %c0_i32_1 = arith.constant 0 : i32
    return %c0_i32, %c0_i32_0 : i32, i32
  }
}

</mosaic_0001>

<llo_original>
// kernel: biclassifier_pos_forward.1
$region0: #{biclassifier_pos_forward.1}
  #allocation0 [shape = 'u32[]', space=smem, size = 0x4, offset = 0x4, fixed_abs, tag = 'smem constant byte address 0x4 - core index']
  #allocation1 [shape = 'u32[144,128]{1,0:T(1,128)}', space=vmem, size = 0x12000, scoped, tag = 'internal scratch']
  #allocation2 [shape = 'bf16[16,16]{1,0:T(8,128)(2,1)}', space=vmem, size = 0x1000, scoped, tag = 'scratch operand']
  %s0 = inlined_call_operand.vmem [shape: bf16[2,16,8], index: 0, kind: input, shape index: {}]
  %s1 = inlined_call_operand.vmem [shape: bf16[2,2,16,16], index: 1, kind: input, shape index: {}]
  %s2 = inlined_call_operand.hbm [shape: bf16[2,8,32], index: 2, kind: input, shape index: {}]
  %s3 = inlined_call_operand.hbm [shape: f32[2,1,32], index: 3, kind: input, shape index: {}]
  %s4 = inlined_call_operand.vmem [shape: bf16[2,32,32], index: 4, kind: input, shape index: {}]
  %s5 = inlined_call_operand.vmem [shape: bf16[2,32,32], index: 5, kind: input, shape index: {}]
  %s6 = inlined_call_operand.hbm [shape: f32[2,1,32], index: 6, kind: input, shape index: {}]
  %s7 = inlined_call_operand.vmem [shape: bf16[2,32,16], index: 7, kind: input, shape index: {}]
  %s8 = inlined_call_operand.vmem [shape: bf16[2,32,16], index: 8, kind: input, shape index: {}]
  %s9 = inlined_call_operand.hbm [shape: f32[2,1,16], index: 9, kind: input, shape index: {}]
  %s10 = inlined_call_operand.hbm [shape: bf16[16,32], index: 10, kind: input, shape index: {}]
  %s11 = inlined_call_operand.hbm [shape: bf16[16,32], index: 11, kind: input, shape index: {}]
  %s12 = inlined_call_operand.hbm [shape: f32[1,32], index: 12, kind: input, shape index: {}]
  %s13 = inlined_call_operand.hbm [shape: bf16[32,128], index: 13, kind: input, shape index: {}]
  %s14 = inlined_call_operand.hbm [shape: f32[1,128], index: 14, kind: input, shape index: {}]
  %s15 = inlined_call_operand.vmem [shape: f32[16,128], index: 15, kind: output, shape index: {}]
  %s16 = sld [smem:[#allocation0]]
  $region137: #{biclassifier_pos_forward.1} parent=0
    _
  %s18 = ssub.s32 1, %s16
  %s19 = scalar_select 0, %s18, %s16
  $region1: #{biclassifier_pos_forward.1} parent=0
    #allocation3 [shape = 'u8[4096]{0}', space=vmem, size = 0x1000, scoped, tag = 'input window, operand 2']
    #allocation4 [shape = 's32[2]{0}', space=sflag, size = 0x8, scoped, tag = 'scoped memory for biclassifier_pos_forward.1']
    #allocation5 [shape = 'u8[1024]{0}', space=vmem, size = 0x400, scoped, tag = 'input window, operand 3']
    #allocation6 [shape = 's32[2]{0}', space=sflag, size = 0x8, scoped, tag = 'scoped memory for biclassifier_pos_forward.1']
    #allocation7 [shape = 'u8[1024]{0}', space=vmem, size = 0x400, scoped, tag = 'input window, operand 6']
    #allocation8 [shape = 'u8[1024]{0}', space=vmem, size = 0x400, scoped, tag = 'input window, operand 9']
    #allocation9 [shape = 's32[2]{0}', space=sflag, size = 0x8, scoped, tag = 'scoped memory for biclassifier_pos_forward.1']
    #allocation10 [shape = 'u8[4096]{0}', space=vmem, size = 0x1000, scoped, tag = 'input window, operand 10, single buffered']
    #allocation11 [shape = 'u8[4096]{0}', space=vmem, size = 0x1000, scoped, tag = 'input window, operand 11, single buffered']
    #allocation12 [shape = 's32[1]{0}', space=sflag, size = 0x4, scoped, tag = 'scoped memory for biclassifier_pos_forward.1']
    #allocation13 [shape = 'u8[512]{0}', space=vmem, size = 0x400, scoped, tag = 'input window, operand 12, single buffered']
    #allocation14 [shape = 'u8[8192]{0}', space=vmem, size = 0x2000, scoped, tag = 'input window, operand 13, single buffered']
    #allocation15 [shape = 's32[1]{0}', space=sflag, size = 0x4, scoped, tag = 'scoped memory for biclassifier_pos_forward.1']
    #allocation16 [shape = 'u8[512]{0}', space=vmem, size = 0x400, scoped, tag = 'input window, operand 14, single buffered']
    %20 = vsyncpa [#allocation4], 0
    %s21 = scalar_lea.sflag [#allocation4], 1
    %22 = vsyncpa %s21, 0
    %23 = vsyncpa [#allocation6], 0
    %s24 = scalar_lea.sflag [#allocation6], 1
    %25 = vsyncpa %s24, 0
    %26 = vsyncpa [#allocation9], 0
    %s27 = scalar_lea.sflag [#allocation9], 1
    %28 = vsyncpa %s27, 0
    %29 = vsyncpa [#allocation12], 0
    %30 = vsyncpa [#allocation15], 0
    loop: start=0, step=1, limit=4
    $region2: #{biclassifier_pos_forward.1} parent=1 // loop_pre_header
      _
    $region3: #{biclassifier_pos_forward.1} parent=1 // loop_header
      %s32 = sphi 0, %s36
      %p33 = scmp.ge.s32.totalorder %s32, 4
      %s42 = sphi 0, %s44
      %s45 = sphi 0, %s42
      %s46 = sphi 0, %s45
      %s62 = sphi 0, %s46
      %s68 = sphi 0, %s70
      %s71 = sphi 0, %s68
      %s72 = sphi 0, %s71
      %s88 = sphi 0, %s72
      %s94 = sphi 0, %s96
      %s97 = sphi 0, %s94
      %s98 = sphi 0, %s97
      %s114 = sphi 0, %s98
      %s120 = sphi 0, %s122
      %s123 = sphi 0, %s120
      %s124 = sphi 0, %s123
      %s140 = sphi 0, %s124
      %s146 = sphi 0, %s148
      %s149 = sphi 0, %s146
      %s150 = sphi 0, %s149
      %s166 = sphi 0, %s150
      %s172 = sphi 0, %s174
      %s175 = sphi 0, %s172
      %s176 = sphi 0, %s175
      %s192 = sphi 0, %s176
      %s198 = sphi 0, %s200
      %s201 = sphi 0, %s198
      %s202 = sphi 0, %s201
      %s218 = sphi 0, %s202
      %s224 = sphi 0, %s226
      %s227 = sphi 0, %s224
      %s228 = sphi 0, %s227
      %s244 = sphi 0, %s228
      %s250 = sphi 0, %s252
      %s253 = sphi 0, %s250
      %s254 = sphi 0, %s253
      %s270 = sphi 0, %s254
      %s276 = sphi 0, %s278
      %s279 = sphi 0, %s276
      %s280 = sphi 0, %s279
      %s296 = sphi 0, %s280
      %s300 = sphi 0, %s300
      %s302 = sphi 0, %s300
      %s303 = sphi 0, %s302
      %s317 = sphi 0, %s303
      %s321 = sphi 0, %s321
      %s323 = sphi 0, %s321
      %s324 = sphi 0, %s323
      %s338 = sphi 0, %s324
      %s342 = sphi 0, %s342
      %s344 = sphi 0, %s342
      %s345 = sphi 0, %s344
      %s359 = sphi 0, %s345
      %s363 = sphi 0, %s363
      %s365 = sphi 0, %s363
      %s366 = sphi 0, %s365
      %s380 = sphi 0, %s366
      %s384 = sphi 0, %s384
      %s386 = sphi 0, %s384
      %s387 = sphi 0, %s386
      %s401 = sphi 0, %s387
      %s405 = sphi 0, %s405
      %s407 = sphi 0, %s405
      %s408 = sphi 0, %s407
      %s422 = sphi 0, %s408
    $region4: #{biclassifier_pos_forward.1} parent=1 // loop_header_branch
      %35 = sbr.rel (%p33) target = $region8
    $region5: #{biclassifier_pos_forward.1} parent=1 // loop_body
      %s37 = ssub.s32 %s32, 1
      %s38 = ssub.s32 %s32, 2
      %s39 = sadd.s32 %s32, 1
      %s40 = ssub.s32 %s32, %s39
      %p41 = scmp.eq.s32.totalorder %s40, 0
      %s43 = sadd.s32 %s42, 1
      %s44 = scalar_select %p41, %s42, %s43
      %p47 = pneg %p41
      %p48 = scmp.eq.s32.totalorder %s32, 1
      %p49 = por %p47, %p48
      %p50 = scmp.ne.s32.totalorder %s42, %s45
      %p51 = scmp.eq.s32.totalorder %s32, 0
      %p52 = por %p50, %p51
      %p53 = scmp.ne.s32.totalorder %s42, %s45
      %p54 = scmp.eq.s32.totalorder %s37, 1
      %p55 = por %p53, %p54
      %p56 = scmp.ne.s32.totalorder %s45, %s46
      %p57 = scmp.eq.s32.totalorder %s37, 0
      %p58 = por %p56, %p57
      %p59 = scmp.ne.s32.totalorder %s45, %s46
      %p60 = scmp.eq.s32.totalorder %s38, 1
      %p61 = por %p59, %p60
      %p63 = scmp.ne.s32.totalorder %s46, %s62
      %p64 = scmp.eq.s32.totalorder %s38, 0
      %p65 = por %p63, %p64
      %s66 = ssub.s32 %s32, %s39
      %p67 = scmp.eq.s32.totalorder %s66, 0
      %s69 = sadd.s32 %s68, 1
      %s70 = scalar_select %p67, %s68, %s69
      %p73 = pneg %p67
      %p74 = scmp.eq.s32.totalorder %s32, 1
      %p75 = por %p73, %p74
      %p76 = scmp.ne.s32.totalorder %s68, %s71
      %p77 = scmp.eq.s32.totalorder %s32, 0
      %p78 = por %p76, %p77
      %p79 = scmp.ne.s32.totalorder %s68, %s71
      %p80 = scmp.eq.s32.totalorder %s37, 1
      %p81 = por %p79, %p80
      %p82 = scmp.ne.s32.totalorder %s71, %s72
      %p83 = scmp.eq.s32.totalorder %s37, 0
      %p84 = por %p82, %p83
      %p85 = scmp.ne.s32.totalorder %s71, %s72
      %p86 = scmp.eq.s32.totalorder %s38, 1
      %p87 = por %p85, %p86
      %p89 = scmp.ne.s32.totalorder %s72, %s88
      %p90 = scmp.eq.s32.totalorder %s38, 0
      %p91 = por %p89, %p90
      %s92 = ssub.s32 %s32, %s39
      %p93 = scmp.eq.s32.totalorder %s92, 0
      %s95 = sadd.s32 %s94, 1
      %s96 = scalar_select %p93, %s94, %s95
      %p99 = pneg %p93
      %p100 = scmp.eq.s32.totalorder %s32, 1
      %p101 = por %p99, %p100
      %p102 = scmp.ne.s32.totalorder %s94, %s97
      %p103 = scmp.eq.s32.totalorder %s32, 0
      %p104 = por %p102, %p103
      %p105 = scmp.ne.s32.totalorder %s94, %s97
      %p106 = scmp.eq.s32.totalorder %s37, 1
      %p107 = por %p105, %p106
      %p108 = scmp.ne.s32.totalorder %s97, %s98
      %p109 = scmp.eq.s32.totalorder %s37, 0
      %p110 = por %p108, %p109
      %p111 = scmp.ne.s32.totalorder %s97, %s98
      %p112 = scmp.eq.s32.totalorder %s38, 1
      %p113 = por %p111, %p112
      %p115 = scmp.ne.s32.totalorder %s98, %s114
      %p116 = scmp.eq.s32.totalorder %s38, 0
      %p117 = por %p115, %p116
      %s118 = ssub.s32 %s32, %s39
      %p119 = scmp.eq.s32.totalorder %s118, 0
      %s121 = sadd.s32 %s120, 1
      %s122 = scalar_select %p119, %s120, %s121
      %p125 = pneg %p119
      %p126 = scmp.eq.s32.totalorder %s32, 1
      %p127 = por %p125, %p126
      %p128 = scmp.ne.s32.totalorder %s120, %s123
      %p129 = scmp.eq.s32.totalorder %s32, 0
      %p130 = por %p128, %p129
      %p131 = scmp.ne.s32.totalorder %s120, %s123
      %p132 = scmp.eq.s32.totalorder %s37, 1
      %p133 = por %p131, %p132
      %p134 = scmp.ne.s32.totalorder %s123, %s124
      %p135 = scmp.eq.s32.totalorder %s37, 0
      %p136 = por %p134, %p135
      %p137 = scmp.ne.s32.totalorder %s123, %s124
      %p138 = scmp.eq.s32.totalorder %s38, 1
      %p139 = por %p137, %p138
      %p141 = scmp.ne.s32.totalorder %s124, %s140
      %p142 = scmp.eq.s32.totalorder %s38, 0
      %p143 = por %p141, %p142
      %s144 = ssub.s32 %s32, %s39
      %p145 = scmp.eq.s32.totalorder %s144, 0
      %s147 = sadd.s32 %s146, 1
      %s148 = scalar_select %p145, %s146, %s147
      %p151 = pneg %p145
      %p152 = scmp.eq.s32.totalorder %s32, 1
      %p153 = por %p151, %p152
      %p154 = scmp.ne.s32.totalorder %s146, %s149
      %p155 = scmp.eq.s32.totalorder %s32, 0
      %p156 = por %p154, %p155
      %p157 = scmp.ne.s32.totalorder %s146, %s149
      %p158 = scmp.eq.s32.totalorder %s37, 1
      %p159 = por %p157, %p158
      %p160 = scmp.ne.s32.totalorder %s149, %s150
      %p161 = scmp.eq.s32.totalorder %s37, 0
      %p162 = por %p160, %p161
      %p163 = scmp.ne.s32.totalorder %s149, %s150
      %p164 = scmp.eq.s32.totalorder %s38, 1
      %p165 = por %p163, %p164
      %p167 = scmp.ne.s32.totalorder %s150, %s166
      %p168 = scmp.eq.s32.totalorder %s38, 0
      %p169 = por %p167, %p168
      %s170 = ssub.s32 %s32, %s39
      %p171 = scmp.eq.s32.totalorder %s170, 0
      %s173 = sadd.s32 %s172, 1
      %s174 = scalar_select %p171, %s172, %s173
      %p177 = pneg %p171
      %p178 = scmp.eq.s32.totalorder %s32, 1
      %p179 = por %p177, %p178
      %p180 = scmp.ne.s32.totalorder %s172, %s175
      %p181 = scmp.eq.s32.totalorder %s32, 0
      %p182 = por %p180, %p181
      %p183 = scmp.ne.s32.totalorder %s172, %s175
      %p184 = scmp.eq.s32.totalorder %s37, 1
      %p185 = por %p183, %p184
      %p186 = scmp.ne.s32.totalorder %s175, %s176
      %p187 = scmp.eq.s32.totalorder %s37, 0
      %p188 = por %p186, %p187
      %p189 = scmp.ne.s32.totalorder %s175, %s176
      %p190 = scmp.eq.s32.totalorder %s38, 1
      %p191 = por %p189, %p190
      %p193 = scmp.ne.s32.totalorder %s176, %s192
      %p194 = scmp.eq.s32.totalorder %s38, 0
      %p195 = por %p193, %p194
      %s196 = ssub.s32 %s32, %s39
      %p197 = scmp.eq.s32.totalorder %s196, 0
      %s199 = sadd.s32 %s198, 1
      %s200 = scalar_select %p197, %s198, %s199
      %p203 = pneg %p197
      %p204 = scmp.eq.s32.totalorder %s32, 1
      %p205 = por %p203, %p204
      %p206 = scmp.ne.s32.totalorder %s198, %s201
      %p207 = scmp.eq.s32.totalorder %s32, 0
      %p208 = por %p206, %p207
      %p209 = scmp.ne.s32.totalorder %s198, %s201
      %p210 = scmp.eq.s32.totalorder %s37, 1
      %p211 = por %p209, %p210
      %p212 = scmp.ne.s32.totalorder %s201, %s202
      %p213 = scmp.eq.s32.totalorder %s37, 0
      %p214 = por %p212, %p213
      %p215 = scmp.ne.s32.totalorder %s201, %s202
      %p216 = scmp.eq.s32.totalorder %s38, 1
      %p217 = por %p215, %p216
      %p219 = scmp.ne.s32.totalorder %s202, %s218
      %p220 = scmp.eq.s32.totalorder %s38, 0
      %p221 = por %p219, %p220
      %s222 = ssub.s32 %s32, %s39
      %p223 = scmp.eq.s32.totalorder %s222, 0
      %s225 = sadd.s32 %s224, 1
      %s226 = scalar_select %p223, %s224, %s225
      %p229 = pneg %p223
      %p230 = scmp.eq.s32.totalorder %s32, 1
      %p231 = por %p229, %p230
      %p232 = scmp.ne.s32.totalorder %s224, %s227
      %p233 = scmp.eq.s32.totalorder %s32, 0
      %p234 = por %p232, %p233
      %p235 = scmp.ne.s32.totalorder %s224, %s227
      %p236 = scmp.eq.s32.totalorder %s37, 1
      %p237 = por %p235, %p236
      %p238 = scmp.ne.s32.totalorder %s227, %s228
      %p239 = scmp.eq.s32.totalorder %s37, 0
      %p240 = por %p238, %p239
      %p241 = scmp.ne.s32.totalorder %s227, %s228
      %p242 = scmp.eq.s32.totalorder %s38, 1
      %p243 = por %p241, %p242
      %p245 = scmp.ne.s32.totalorder %s228, %s244
      %p246 = scmp.eq.s32.totalorder %s38, 0
      %p247 = por %p245, %p246
      %s248 = ssub.s32 %s32, %s39
      %p249 = scmp.eq.s32.totalorder %s248, 0
      %s251 = sadd.s32 %s250, 1
      %s252 = scalar_select %p249, %s250, %s251
      %p255 = pneg %p249
      %p256 = scmp.eq.s32.totalorder %s32, 1
      %p257 = por %p255, %p256
      %p258 = scmp.ne.s32.totalorder %s250, %s253
      %p259 = scmp.eq.s32.totalorder %s32, 0
      %p260 = por %p258, %p259
      %p261 = scmp.ne.s32.totalorder %s250, %s253
      %p262 = scmp.eq.s32.totalorder %s37, 1
      %p263 = por %p261, %p262
      %p264 = scmp.ne.s32.totalorder %s253, %s254
      %p265 = scmp.eq.s32.totalorder %s37, 0
      %p266 = por %p264, %p265
      %p267 = scmp.ne.s32.totalorder %s253, %s254
      %p268 = scmp.eq.s32.totalorder %s38, 1
      %p269 = por %p267, %p268
      %p271 = scmp.ne.s32.totalorder %s254, %s270
      %p272 = scmp.eq.s32.totalorder %s38, 0
      %p273 = por %p271, %p272
      %s274 = ssub.s32 %s32, %s39
      %p275 = scmp.eq.s32.totalorder %s274, 0
      %s277 = sadd.s32 %s276, 1
      %s278 = scalar_select %p275, %s276, %s277
      %p281 = pneg %p275
      %p282 = scmp.eq.s32.totalorder %s32, 1
      %p283 = por %p281, %p282
      %p284 = scmp.ne.s32.totalorder %s276, %s279
      %p285 = scmp.eq.s32.totalorder %s32, 0
      %p286 = por %p284, %p285
      %p287 = scmp.ne.s32.totalorder %s276, %s279
      %p288 = scmp.eq.s32.totalorder %s37, 1
      %p289 = por %p287, %p288
      %p290 = scmp.ne.s32.totalorder %s279, %s280
      %p291 = scmp.eq.s32.totalorder %s37, 0
      %p292 = por %p290, %p291
      %p293 = scmp.ne.s32.totalorder %s279, %s280
      %p294 = scmp.eq.s32.totalorder %s38, 1
      %p295 = por %p293, %p294
      %p297 = scmp.ne.s32.totalorder %s280, %s296
      %p298 = scmp.eq.s32.totalorder %s38, 0
      %p299 = por %p297, %p298
      %s301 = sadd.s32 %s300, 1
      %p304 = scmp.eq.s32.totalorder %s32, 1
      %p305 = scmp.ne.s32.totalorder %s300, %s302
      %p306 = scmp.eq.s32.totalorder %s32, 0
      %p307 = por %p305, %p306
      %p308 = scmp.ne.s32.totalorder %s300, %s302
      %p309 = scmp.eq.s32.totalorder %s37, 1
      %p310 = por %p308, %p309
      %p311 = scmp.ne.s32.totalorder %s302, %s303
      %p312 = scmp.eq.s32.totalorder %s37, 0
      %p313 = por %p311, %p312
      %p314 = scmp.ne.s32.totalorder %s302, %s303
      %p315 = scmp.eq.s32.totalorder %s38, 1
      %p316 = por %p314, %p315
      %p318 = scmp.ne.s32.totalorder %s303, %s317
      %p319 = scmp.eq.s32.totalorder %s38, 0
      %p320 = por %p318, %p319
      %s322 = sadd.s32 %s321, 1
      %p325 = scmp.eq.s32.totalorder %s32, 1
      %p326 = scmp.ne.s32.totalorder %s321, %s323
      %p327 = scmp.eq.s32.totalorder %s32, 0
      %p328 = por %p326, %p327
      %p329 = scmp.ne.s32.totalorder %s321, %s323
      %p330 = scmp.eq.s32.totalorder %s37, 1
      %p331 = por %p329, %p330
      %p332 = scmp.ne.s32.totalorder %s323, %s324
      %p333 = scmp.eq.s32.totalorder %s37, 0
      %p334 = por %p332, %p333
      %p335 = scmp.ne.s32.totalorder %s323, %s324
      %p336 = scmp.eq.s32.totalorder %s38, 1
      %p337 = por %p335, %p336
      %p339 = scmp.ne.s32.totalorder %s324, %s338
      %p340 = scmp.eq.s32.totalorder %s38, 0
      %p341 = por %p339, %p340
      %s343 = sadd.s32 %s342, 1
      %p346 = scmp.eq.s32.totalorder %s32, 1
      %p347 = scmp.ne.s32.totalorder %s342, %s344
      %p348 = scmp.eq.s32.totalorder %s32, 0
      %p349 = por %p347, %p348
      %p350 = scmp.ne.s32.totalorder %s342, %s344
      %p351 = scmp.eq.s32.totalorder %s37, 1
      %p352 = por %p350, %p351
      %p353 = scmp.ne.s32.totalorder %s344, %s345
      %p354 = scmp.eq.s32.totalorder %s37, 0
      %p355 = por %p353, %p354
      %p356 = scmp.ne.s32.totalorder %s344, %s345
      %p357 = scmp.eq.s32.totalorder %s38, 1
      %p358 = por %p356, %p357
      %p360 = scmp.ne.s32.totalorder %s345, %s359
      %p361 = scmp.eq.s32.totalorder %s38, 0
      %p362 = por %p360, %p361
      %s364 = sadd.s32 %s363, 1
      %p367 = scmp.eq.s32.totalorder %s32, 1
      %p368 = scmp.ne.s32.totalorder %s363, %s365
      %p369 = scmp.eq.s32.totalorder %s32, 0
      %p370 = por %p368, %p369
      %p371 = scmp.ne.s32.totalorder %s363, %s365
      %p372 = scmp.eq.s32.totalorder %s37, 1
      %p373 = por %p371, %p372
      %p374 = scmp.ne.s32.totalorder %s365, %s366
      %p375 = scmp.eq.s32.totalorder %s37, 0
      %p376 = por %p374, %p375
      %p377 = scmp.ne.s32.totalorder %s365, %s366
      %p378 = scmp.eq.s32.totalorder %s38, 1
      %p379 = por %p377, %p378
      %p381 = scmp.ne.s32.totalorder %s366, %s380
      %p382 = scmp.eq.s32.totalorder %s38, 0
      %p383 = por %p381, %p382
      %s385 = sadd.s32 %s384, 1
      %p388 = scmp.eq.s32.totalorder %s32, 1
      %p389 = scmp.ne.s32.totalorder %s384, %s386
      %p390 = scmp.eq.s32.totalorder %s32, 0
      %p391 = por %p389, %p390
      %p392 = scmp.ne.s32.totalorder %s384, %s386
      %p393 = scmp.eq.s32.totalorder %s37, 1
      %p394 = por %p392, %p393
      %p395 = scmp.ne.s32.totalorder %s386, %s387
      %p396 = scmp.eq.s32.totalorder %s37, 0
      %p397 = por %p395, %p396
      %p398 = scmp.ne.s32.totalorder %s386, %s387
      %p399 = scmp.eq.s32.totalorder %s38, 1
      %p400 = por %p398, %p399
      %p402 = scmp.ne.s32.totalorder %s387, %s401
      %p403 = scmp.eq.s32.totalorder %s38, 0
      %p404 = por %p402, %p403
      %s406 = sadd.s32 %s405, 1
      %p409 = scmp.eq.s32.totalorder %s32, 1
      %p410 = scmp.ne.s32.totalorder %s405, %s407
      %p411 = scmp.eq.s32.totalorder %s32, 0
      %p412 = por %p410, %p411
      %p413 = scmp.ne.s32.totalorder %s405, %s407
      %p414 = scmp.eq.s32.totalorder %s37, 1
      %p415 = por %p413, %p414
      %p416 = scmp.ne.s32.totalorder %s407, %s408
      %p417 = scmp.eq.s32.totalorder %s37, 0
      %p418 = por %p416, %p417
      %p419 = scmp.ne.s32.totalorder %s407, %s408
      %p420 = scmp.eq.s32.totalorder %s38, 1
      %p421 = por %p419, %p420
      %p423 = scmp.ne.s32.totalorder %s408, %s422
      %p424 = scmp.eq.s32.totalorder %s38, 0
      %p425 = por %p423, %p424
      %p426 = scmp.le.s32.totalorder 1, %s32
      %p427 = scmp.lt.s32.totalorder %s32, 3
      %p428 = pnand %p426, %p427
      %p429 = pneg %p428
      // Predicated region
      $region9: #{biclassifier_pos_forward.1} parent=5 // pred_check
        _
      $region10: #{biclassifier_pos_forward.1} parent=5 // pred_check_branch
        %431 = sbr.rel (%p428) target = $region12
      $region11: #{biclassifier_pos_forward.1} parent=5 // pred_region
        %s432 = ssub.s32 %s32, 1
        // Predicated region
        $region13: #{biclassifier_pos_forward.1} parent=11 // pred_check
          %p433 = pneg %p313
        $region14: #{biclassifier_pos_forward.1} parent=11 // pred_check_branch
          %435 = sbr.rel (%p433) target = $region16
        $region15: #{biclassifier_pos_forward.1} parent=11 // pred_region
          %s437 = ssub.s32 128, 128
          %438 = vsyncadd [#allocation9], %s437
          %s439 = sshll.u32 [#allocation10], 4
          %s440 = int_to_ptr.vmem [resolvable:$true] %s439
          %445 = dma.hbm_to_vmem [thread:$0]  %s10, 128, %s440, [#allocation9], 64, 64, 4
        $region16: #{biclassifier_pos_forward.1} parent=11 // pred_fallthru
          _
        // Predicated region
        $region17: #{biclassifier_pos_forward.1} parent=11 // pred_check
          %p446 = pneg %p334
        $region18: #{biclassifier_pos_forward.1} parent=11 // pred_check_branch
          %448 = sbr.rel (%p446) target = $region20
        $region19: #{biclassifier_pos_forward.1} parent=11 // pred_region
          %s450 = ssub.s32 128, 128
          %451 = vsyncadd [#allocation12], %s450
          %s452 = sshll.u32 [#allocation11], 4
          %s453 = int_to_ptr.vmem [resolvable:$true] %s452
          %458 = dma.hbm_to_vmem [thread:$0]  %s11, 128, %s453, [#allocation12], 64, 64, 4
        $region20: #{biclassifier_pos_forward.1} parent=11 // pred_fallthru
          _
        // Predicated region
        $region21: #{biclassifier_pos_forward.1} parent=11 // pred_check
          %p459 = pneg %p355
        $region22: #{biclassifier_pos_forward.1} parent=11 // pred_check_branch
          %461 = sbr.rel (%p459) target = $region24
        $region23: #{biclassifier_pos_forward.1} parent=11 // pred_region
          %s463 = ssub.s32 16, 16
          %464 = vsyncadd [#allocation12], %s463
          %s466 = sshll.u32 [#allocation13], 4
          %s467 = int_to_ptr.vmem [resolvable:$true] %s466
          %469 = dma.hbm_to_vmem [thread:$0]  %s12, 16, %s467, [#allocation12]
        $region24: #{biclassifier_pos_forward.1} parent=11 // pred_fallthru
          _
        // Predicated region
        $region25: #{biclassifier_pos_forward.1} parent=11 // pred_check
          %p470 = pneg %p376
        $region26: #{biclassifier_pos_forward.1} parent=11 // pred_check_branch
          %472 = sbr.rel (%p470) target = $region28
        $region27: #{biclassifier_pos_forward.1} parent=11 // pred_region
          %s474 = ssub.s32 256, 256
          %475 = vsyncadd [#allocation15], %s474
          %s476 = sshll.u32 [#allocation14], 4
          %s477 = int_to_ptr.vmem [resolvable:$true] %s476
          %482 = dma.hbm_to_vmem [thread:$0]  %s13, 256, %s477, [#allocation15], 64, 64, 4
        $region28: #{biclassifier_pos_forward.1} parent=11 // pred_fallthru
          _
        // Predicated region
        $region29: #{biclassifier_pos_forward.1} parent=11 // pred_check
          %p483 = pneg %p397
        $region30: #{biclassifier_pos_forward.1} parent=11 // pred_check_branch
          %485 = sbr.rel (%p483) target = $region32
        $region31: #{biclassifier_pos_forward.1} parent=11 // pred_region
          %s487 = ssub.s32 16, 16
          %488 = vsyncadd [#allocation15], %s487
          %s490 = sshll.u32 [#allocation16], 4
          %s491 = int_to_ptr.vmem [resolvable:$true] %s490
          %493 = dma.hbm_to_vmem [thread:$0]  %s14, 16, %s491, [#allocation15]
        $region32: #{biclassifier_pos_forward.1} parent=11 // pred_fallthru
          _
      $region12: #{biclassifier_pos_forward.1} parent=5 // pred_fallthru
        _
      %p494 = scmp.lt.s32.totalorder %s32, 2
      // Predicated region
      $region33: #{biclassifier_pos_forward.1} parent=5 // pred_check
        %p495 = pneg %p494
      $region34: #{biclassifier_pos_forward.1} parent=5 // pred_check_branch
        %497 = sbr.rel (%p495) target = $region36
      $region35: #{biclassifier_pos_forward.1} parent=5 // pred_region
        // Predicated region
        $region37: #{biclassifier_pos_forward.1} parent=35 // pred_check
          %p498 = pneg %p52
        $region38: #{biclassifier_pos_forward.1} parent=35 // pred_check_branch
          %500 = sbr.rel (%p498) target = $region40
        $region39: #{biclassifier_pos_forward.1} parent=35 // pred_region
          %p501 = scmp.lt.s32.totalorder %s32, 1
          %s502 = scalar_select %p501, %s32, 1
          %s503 = smul.addr %s502, 2
          %s504 = smul.addr %s503, 4
          %s505 = scalar_lea.vmem %s0, %s504
        $region40: #{biclassifier_pos_forward.1} parent=35 // pred_fallthru
          _
        // Predicated region
        $region41: #{biclassifier_pos_forward.1} parent=35 // pred_check
          %p506 = pneg %p78
        $region42: #{biclassifier_pos_forward.1} parent=35 // pred_check_branch
          %508 = sbr.rel (%p506) target = $region44
        $region43: #{biclassifier_pos_forward.1} parent=35 // pred_region
          %p509 = scmp.lt.s32.totalorder %s32, 1
          %s510 = scalar_select %p509, %s32, 1
          %s511 = smul.addr %s510, 4
          %s512 = smul.addr %s511, 4
          %s513 = scalar_lea.vmem %s1, %s512
        $region44: #{biclassifier_pos_forward.1} parent=35 // pred_fallthru
          _
        // Predicated region
        $region45: #{biclassifier_pos_forward.1} parent=35 // pred_check
          %p514 = pneg %p104
        $region46: #{biclassifier_pos_forward.1} parent=35 // pred_check_branch
          %516 = sbr.rel (%p514) target = $region48
        $region47: #{biclassifier_pos_forward.1} parent=35 // pred_region
          %s517 = sand.u32 %s94, 1
          %s518 = scalar_lea.sflag [#allocation4], %s517
          %s519 = sand.u32 %s94, 1
          %s520 = smul.addr %s519, 4
          %s521 = scalar_lea.vmem [#allocation3], %s520
          %s523 = ssub.s32 64, 64
          %524 = vsyncadd %s518, %s523
          %s525 = smul.addr %s32, 64
          %s526 = scalar_lea.hbm %s2, %s525
          %s528 = sshll.u32 %s521, 4
          %s529 = int_to_ptr.vmem [resolvable:$true] %s528
          %531 = dma.hbm_to_vmem [thread:$0]  %s526, 64, %s529, %s518
        $region48: #{biclassifier_pos_forward.1} parent=35 // pred_fallthru
          _
        // Predicated region
        $region49: #{biclassifier_pos_forward.1} parent=35 // pred_check
          %p532 = pneg %p130
        $region50: #{biclassifier_pos_forward.1} parent=35 // pred_check_branch
          %534 = sbr.rel (%p532) target = $region52
        $region51: #{biclassifier_pos_forward.1} parent=35 // pred_region
          %s535 = sand.u32 %s32, 1
          %s536 = scalar_lea.sflag [#allocation6], %s535
          %s537 = sand.u32 %s120, 1
          %s538 = scalar_lea.vmem [#allocation5], %s537
          %s540 = ssub.s32 16, 16
          %541 = vsyncadd %s536, %s540
          %s542 = smul.addr %s32, 16
          %s543 = scalar_lea.hbm %s3, %s542
          %s545 = sshll.u32 %s538, 4
          %s546 = int_to_ptr.vmem [resolvable:$true] %s545
          %548 = dma.hbm_to_vmem [thread:$0]  %s543, 16, %s546, %s536
        $region52: #{biclassifier_pos_forward.1} parent=35 // pred_fallthru
          _
        // Predicated region
        $region53: #{biclassifier_pos_forward.1} parent=35 // pred_check
          %p549 = pneg %p156
        $region54: #{biclassifier_pos_forward.1} parent=35 // pred_check_branch
          %551 = sbr.rel (%p549) target = $region56
        $region55: #{biclassifier_pos_forward.1} parent=35 // pred_region
          %p552 = scmp.lt.s32.totalorder %s32, 1
          %s553 = scalar_select %p552, %s32, 1
          %s554 = smul.addr %s553, 4
          %s555 = smul.addr %s554, 4
          %s556 = scalar_lea.vmem %s4, %s555
        $region56: #{biclassifier_pos_forward.1} parent=35 // pred_fallthru
          _
        // Predicated region
        $region57: #{biclassifier_pos_forward.1} parent=35 // pred_check
          %p557 = pneg %p182
        $region58: #{biclassifier_pos_forward.1} parent=35 // pred_check_branch
          %559 = sbr.rel (%p557) target = $region60
        $region59: #{biclassifier_pos_forward.1} parent=35 // pred_region
          %p560 = scmp.lt.s32.totalorder %s32, 1
          %s561 = scalar_select %p560, %s32, 1
          %s562 = smul.addr %s561, 4
          %s563 = smul.addr %s562, 4
          %s564 = scalar_lea.vmem %s5, %s563
        $region60: #{biclassifier_pos_forward.1} parent=35 // pred_fallthru
          _
        // Predicated region
        $region61: #{biclassifier_pos_forward.1} parent=35 // pred_check
          %p565 = pneg %p208
        $region62: #{biclassifier_pos_forward.1} parent=35 // pred_check_branch
          %567 = sbr.rel (%p565) target = $region64
        $region63: #{biclassifier_pos_forward.1} parent=35 // pred_region
          %s568 = sand.u32 %s32, 1
          %s569 = scalar_lea.sflag [#allocation6], %s568
          %s570 = sand.u32 %s198, 1
          %s571 = scalar_lea.vmem [#allocation7], %s570
          %s573 = ssub.s32 16, 16
          %574 = vsyncadd %s569, %s573
          %s575 = smul.addr %s32, 16
          %s576 = scalar_lea.hbm %s6, %s575
          %s578 = sshll.u32 %s571, 4
          %s579 = int_to_ptr.vmem [resolvable:$true] %s578
          %581 = dma.hbm_to_vmem [thread:$0]  %s576, 16, %s579, %s569
        $region64: #{biclassifier_pos_forward.1} parent=35 // pred_fallthru
          _
        // Predicated region
        $region65: #{biclassifier_pos_forward.1} parent=35 // pred_check
          %p582 = pneg %p234
        $region66: #{biclassifier_pos_forward.1} parent=35 // pred_check_branch
          %584 = sbr.rel (%p582) target = $region68
        $region67: #{biclassifier_pos_forward.1} parent=35 // pred_region
          %p585 = scmp.lt.s32.totalorder %s32, 1
          %s586 = scalar_select %p585, %s32, 1
          %s587 = smul.addr %s586, 4
          %s588 = smul.addr %s587, 4
          %s589 = scalar_lea.vmem %s7, %s588
        $region68: #{biclassifier_pos_forward.1} parent=35 // pred_fallthru
          _
        // Predicated region
        $region69: #{biclassifier_pos_forward.1} parent=35 // pred_check
          %p590 = pneg %p260
        $region70: #{biclassifier_pos_forward.1} parent=35 // pred_check_branch
          %592 = sbr.rel (%p590) target = $region72
        $region71: #{biclassifier_pos_forward.1} parent=35 // pred_region
          %p593 = scmp.lt.s32.totalorder %s32, 1
          %s594 = scalar_select %p593, %s32, 1
          %s595 = smul.addr %s594, 4
          %s596 = smul.addr %s595, 4
          %s597 = scalar_lea.vmem %s8, %s596
        $region72: #{biclassifier_pos_forward.1} parent=35 // pred_fallthru
          _
        // Predicated region
        $region73: #{biclassifier_pos_forward.1} parent=35 // pred_check
          %p598 = pneg %p286
        $region74: #{biclassifier_pos_forward.1} parent=35 // pred_check_branch
          %600 = sbr.rel (%p598) target = $region76
        $region75: #{biclassifier_pos_forward.1} parent=35 // pred_region
          %s601 = sand.u32 %s32, 1
          %s602 = scalar_lea.sflag [#allocation9], %s601
          %s603 = sand.u32 %s276, 1
          %s604 = scalar_lea.vmem [#allocation8], %s603
          %s606 = ssub.s32 16, 16
          %607 = vsyncadd %s602, %s606
          %s608 = smul.addr %s32, 16
          %s609 = scalar_lea.hbm %s9, %s608
          %s611 = sshll.u32 %s604, 4
          %s612 = int_to_ptr.vmem [resolvable:$true] %s611
          %614 = dma.hbm_to_vmem [thread:$0]  %s609, 16, %s612, %s602
        $region76: #{biclassifier_pos_forward.1} parent=35 // pred_fallthru
          _
      $region36: #{biclassifier_pos_forward.1} parent=5 // pred_fallthru
        _
      %p615 = scmp.le.s32.totalorder 1, %s32
      %p616 = scmp.lt.s32.totalorder %s32, 3
      %p617 = pnand %p615, %p616
      %p618 = pneg %p617
      // Predicated region
      $region77: #{biclassifier_pos_forward.1} parent=5 // pred_check
        _
      $region78: #{biclassifier_pos_forward.1} parent=5 // pred_check_branch
        %620 = sbr.rel (%p617) target = $region80
      $region79: #{biclassifier_pos_forward.1} parent=5 // pred_region
        %s621 = ssub.s32 %s32, 1
        %s622 = sand.u32 %s97, 1
        %s623 = scalar_lea.sflag [#allocation4], %s622
        %s624 = sand.u32 %s97, 1
        %s625 = smul.addr %s624, 4
        %s626 = scalar_lea.vmem [#allocation3], %s625
        // Predicated region
        $region81: #{biclassifier_pos_forward.1} parent=79 // pred_check
          %p627 = pneg %p110
        $region82: #{biclassifier_pos_forward.1} parent=79 // pred_check_branch
          %629 = sbr.rel (%p627) target = $region84
        $region83: #{biclassifier_pos_forward.1} parent=79 // pred_region
          %630 = dma.done %s623, 64
        $region84: #{biclassifier_pos_forward.1} parent=79 // pred_fallthru
          _
        %s631 = sand.u32 %s37, 1
        %s632 = scalar_lea.sflag [#allocation6], %s631
        %s633 = sand.u32 %s123, 1
        %s634 = scalar_lea.vmem [#allocation5], %s633
        // Predicated region
        $region85: #{biclassifier_pos_forward.1} parent=79 // pred_check
          %p635 = pneg %p136
        $region86: #{biclassifier_pos_forward.1} parent=79 // pred_check_branch
          %637 = sbr.rel (%p635) target = $region88
        $region87: #{biclassifier_pos_forward.1} parent=79 // pred_region
          %638 = dma.done %s632, 16
        $region88: #{biclassifier_pos_forward.1} parent=79 // pred_fallthru
          _
        %s639 = sand.u32 %s37, 1
        %s640 = scalar_lea.sflag [#allocation6], %s639
        %s641 = sand.u32 %s201, 1
        %s642 = scalar_lea.vmem [#allocation7], %s641
        // Predicated region
        $region89: #{biclassifier_pos_forward.1} parent=79 // pred_check
          %p643 = pneg %p214
        $region90: #{biclassifier_pos_forward.1} parent=79 // pred_check_branch
          %645 = sbr.rel (%p643) target = $region92
        $region91: #{biclassifier_pos_forward.1} parent=79 // pred_region
          %646 = dma.done %s640, 16
        $region92: #{biclassifier_pos_forward.1} parent=79 // pred_fallthru
          _
        %s647 = sand.u32 %s37, 1
        %s648 = scalar_lea.sflag [#allocation9], %s647
        %s649 = sand.u32 %s279, 1
        %s650 = scalar_lea.vmem [#allocation8], %s649
        // Predicated region
        $region93: #{biclassifier_pos_forward.1} parent=79 // pred_check
          %p651 = pneg %p292
        $region94: #{biclassifier_pos_forward.1} parent=79 // pred_check_branch
          %653 = sbr.rel (%p651) target = $region96
        $region95: #{biclassifier_pos_forward.1} parent=79 // pred_region
          %654 = dma.done %s648, 16
        $region96: #{biclassifier_pos_forward.1} parent=79 // pred_fallthru
          _
        // Predicated region
        $region97: #{biclassifier_pos_forward.1} parent=79 // pred_check
          %p655 = pneg %p313
        $region98: #{biclassifier_pos_forward.1} parent=79 // pred_check_branch
          %657 = sbr.rel (%p655) target = $region100
        $region99: #{biclassifier_pos_forward.1} parent=79 // pred_region
          %658 = dma.done [#allocation9], 128
        $region100: #{biclassifier_pos_forward.1} parent=79 // pred_fallthru
          _
        // Predicated region
        $region101: #{biclassifier_pos_forward.1} parent=79 // pred_check
          %p659 = pneg %p334
        $region102: #{biclassifier_pos_forward.1} parent=79 // pred_check_branch
          %661 = sbr.rel (%p659) target = $region104
        $region103: #{biclassifier_pos_forward.1} parent=79 // pred_region
          %662 = dma.done [#allocation12], 128
        $region104: #{biclassifier_pos_forward.1} parent=79 // pred_fallthru
          _
        // Predicated region
        $region105: #{biclassifier_pos_forward.1} parent=79 // pred_check
          %p663 = pneg %p355
        $region106: #{biclassifier_pos_forward.1} parent=79 // pred_check_branch
          %665 = sbr.rel (%p663) target = $region108
        $region107: #{biclassifier_pos_forward.1} parent=79 // pred_region
          %666 = dma.done [#allocation12], 16
        $region108: #{biclassifier_pos_forward.1} parent=79 // pred_fallthru
          _
        // Predicated region
        $region109: #{biclassifier_pos_forward.1} parent=79 // pred_check
          %p667 = pneg %p376
        $region110: #{biclassifier_pos_forward.1} parent=79 // pred_check_branch
          %669 = sbr.rel (%p667) target = $region112
        $region111: #{biclassifier_pos_forward.1} parent=79 // pred_region
          %670 = dma.done [#allocation15], 256
        $region112: #{biclassifier_pos_forward.1} parent=79 // pred_fallthru
          _
        // Predicated region
        $region113: #{biclassifier_pos_forward.1} parent=79 // pred_check
          %p671 = pneg %p397
        $region114: #{biclassifier_pos_forward.1} parent=79 // pred_check_branch
          %673 = sbr.rel (%p671) target = $region116
        $region115: #{biclassifier_pos_forward.1} parent=79 // pred_region
          %674 = dma.done [#allocation15], 16
        $region116: #{biclassifier_pos_forward.1} parent=79 // pred_fallthru
          _
        %p675 = scmp.lt.s32.totalorder %s37, 1
        %s676 = scalar_select %p675, %s37, 1
        %s677 = smul.addr %s676, 2
        %s678 = smul.addr %s677, 4
        %s679 = scalar_lea.vmem %s0, %s678
        %p680 = pneg %p58
        %p681 = pneg %p55
        %p682 = scmp.lt.s32.totalorder %s37, 1
        %s683 = scalar_select %p682, %s37, 1
        %s684 = smul.addr %s683, 4
        %s685 = smul.addr %s684, 4
        %s686 = scalar_lea.vmem %s1, %s685
        %p687 = pneg %p84
        %p688 = pneg %p81
        %s689 = sand.u32 %s97, 1
        %s690 = scalar_lea.sflag [#allocation4], %s689
        %s691 = sand.u32 %s97, 1
        %s692 = smul.addr %s691, 4
        %s693 = scalar_lea.vmem [#allocation3], %s692
        %p694 = pneg %p110
        %p695 = pneg %p107
        %s696 = sand.u32 %s37, 1
        %s697 = scalar_lea.sflag [#allocation6], %s696
        %s698 = sand.u32 %s123, 1
        %s699 = scalar_lea.vmem [#allocation5], %s698
        %p700 = pneg %p136
        %p701 = pneg %p133
        %p702 = scmp.lt.s32.totalorder %s37, 1
        %s703 = scalar_select %p702, %s37, 1
        %s704 = smul.addr %s703, 4
        %s705 = smul.addr %s704, 4
        %s706 = scalar_lea.vmem %s4, %s705
        %p707 = pneg %p162
        %p708 = pneg %p159
        %p709 = scmp.lt.s32.totalorder %s37, 1
        %s710 = scalar_select %p709, %s37, 1
        %s711 = smul.addr %s710, 4
        %s712 = smul.addr %s711, 4
        %s713 = scalar_lea.vmem %s5, %s712
        %p714 = pneg %p188
        %p715 = pneg %p185
        %s716 = sand.u32 %s37, 1
        %s717 = scalar_lea.sflag [#allocation6], %s716
        %s718 = sand.u32 %s201, 1
        %s719 = scalar_lea.vmem [#allocation7], %s718
        %p720 = pneg %p214
        %p721 = pneg %p211
        %p722 = scmp.lt.s32.totalorder %s37, 1
        %s723 = scalar_select %p722, %s37, 1
        %s724 = smul.addr %s723, 4
        %s725 = smul.addr %s724, 4
        %s726 = scalar_lea.vmem %s7, %s725
        %p727 = pneg %p240
        %p728 = pneg %p237
        %p729 = scmp.lt.s32.totalorder %s37, 1
        %s730 = scalar_select %p729, %s37, 1
        %s731 = smul.addr %s730, 4
        %s732 = smul.addr %s731, 4
        %s733 = scalar_lea.vmem %s8, %s732
        %p734 = pneg %p266
        %p735 = pneg %p263
        %s736 = sand.u32 %s37, 1
        %s737 = scalar_lea.sflag [#allocation9], %s736
        %s738 = sand.u32 %s279, 1
        %s739 = scalar_lea.vmem [#allocation8], %s738
        %p740 = pneg %p292
        %p741 = pneg %p289
        %p742 = pneg %p313
        %p743 = pneg %p310
        %p744 = pneg %p334
        %p745 = pneg %p331
        %p746 = pneg %p355
        %p747 = pneg %p352
        %p748 = pneg %p376
        %p749 = pneg %p373
        %p750 = pneg %p397
        %p751 = pneg %p394
        %p752 = pneg %p418
        %p753 = pneg %p415
        %p754 = scmp.lt.s32.totalorder %s37, 1
        %s755 = scalar_select %p754, %s37, 1
        %s756 = smul.addr %s755, 2
        %s757 = smul.addr %s756, 4
        %s758 = scalar_lea.vmem %s0, %s757
        %p759 = scmp.lt.s32.totalorder %s37, 1
        %s760 = scalar_select %p759, %s37, 1
        %s761 = smul.addr %s760, 4
        %s762 = smul.addr %s761, 4
        %s763 = scalar_lea.vmem %s1, %s762
        %p764 = scmp.lt.s32.totalorder %s37, 1
        %s765 = scalar_select %p764, %s37, 1
        %s766 = smul.addr %s765, 4
        %s767 = smul.addr %s766, 4
        %s768 = scalar_lea.vmem %s4, %s767
        %p769 = scmp.lt.s32.totalorder %s37, 1
        %s770 = scalar_select %p769, %s37, 1
        %s771 = smul.addr %s770, 4
        %s772 = smul.addr %s771, 4
        %s773 = scalar_lea.vmem %s5, %s772
        %p774 = scmp.lt.s32.totalorder %s37, 1
        %s775 = scalar_select %p774, %s37, 1
        %s776 = smul.addr %s775, 4
        %s777 = smul.addr %s776, 4
        %s778 = scalar_lea.vmem %s7, %s777
        %p779 = scmp.lt.s32.totalorder %s37, 1
        %s780 = scalar_select %p779, %s37, 1
        %s781 = smul.addr %s780, 4
        %s782 = smul.addr %s781, 4
        %s783 = scalar_lea.vmem %s8, %s782
        %v785 = vld [vmem:[%s758] sm:$0xf]
        %v786 = vld [vmem:[%s758 + $0x4] sm:$0xf]
        %v787 = vld [vmem:[%s626] sm:$0xf]
        %v788 = vld [vmem:[%s634] sm:$0x1]
        %v790 = vlaneseq
        %v791 = vshrl.u32 %v790, 7
        %v792 = vsub.s32 0, %v791
        %v793 = vrot.slane %v788, %v792
        %v797 = vunpack.c.l.b16 %v785
        %v798 = vunpack.c.l.b16 %v786
        %v799 = vpack.c.b16 %v798, %v797
        %vm800 = vcmask 64512
        %v802 = vsel %vm800, %v799, 0
        %vm804 = vcmask 1043456
        %v806 = vsel %vm804, %v787, 0
        %808 = vmatprep.subr.bf16.mxu0 0
        %809 = vmatpush1.bf16.msra.mxu0 0
        %810 = vmatprep.subr.bf16.mxu0 0
        %811 = vmatpush1.bf16.msra.mxu0 0
        %812 = vmatprep.subr.bf16.mxu0 0
        %813 = vmatpush1.bf16.msra.mxu0 0
        %814 = vmatprep.subr.bf16.mxu0 0
        %815 = vmatpush1.bf16.msra.mxu0 0
        %816 = vmatprep.subr.bf16.mxu0 0
        %817 = vmatpush1.bf16.msra.mxu0 0
        %818 = vmatprep.subr.bf16.mxu0 0
        %819 = vmatpush1.bf16.msra.mxu0 0
        %820 = vmatprep.subr.bf16.mxu0 0
        %821 = vmatpush1.bf16.msra.mxu0 0
        %822 = vmatprep.subr.bf16.mxu0 0
        %823 = vmatpush1.bf16.msra.mxu0 %v806
        %824 = vmatprep.subr.bf16.mxu0 0
        %825 = vmatpush2.bf16.msra.mxu0 0
        %826 = vmatprep.subr.bf16.mxu0 0
        %827 = vmatpush2.bf16.msra.mxu0 0
        %828 = vmatprep.subr.bf16.mxu0 0
        %829 = vmatpush2.bf16.msra.mxu0 0
        %830 = vmatprep.subr.bf16.mxu0 0
        %831 = vmatpush2.bf16.msra.mxu0 0
        %832 = vmatprep.subr.bf16.mxu0 0
        %833 = vmatpush2.bf16.msra.mxu0 0
        %834 = vmatprep.subr.bf16.mxu0 0
        %835 = vmatpush2.bf16.msra.mxu0 0
        %836 = vmatprep.subr.bf16.mxu0 0
        %837 = vmatpush2.bf16.msra.mxu0 0
        %838 = vmatprep.subr.bf16.mxu0 0
        %839 = vmatpush2.bf16.msra.mxu0 0
        %840 = vmatprep.mubr.bf16.mxu0 0
        %841 = vmatmul.mubr.bf16.gmra.mxu0 %v802
        %v842 = vpop.f32.mrf.mxu0
        %v843 = vadd.f32 %v793, %v842
        %v844 = vpop.f32.mrf.mxu0
        %v845 = vpop.f32.mrf.mxu0
        %v846 = vadd.f32 %v793, %v845
        %v847 = vpop.f32.mrf.mxu0
        %848 = vdwg.mxu0
        %v849 = vmax.f32 %v843, 0.0
        %v850 = vmax.f32 %v846, 0.0
        %v851 = vld [vmem:[%s763] sm:$0xf]
        %v852 = vld [vmem:[%s763 + $0x4] sm:$0xf]
        %v853 = vld [vmem:[%s773] sm:$0xf]
        %v854 = vld [vmem:[%s773 + $0x4] sm:$0xf]
        %v855 = vld [vmem:[%s773 + $0x8] sm:$0xf]
        %v856 = vld [vmem:[%s773 + $0xc] sm:$0xf]
        %v857 = vpack.c.bf16 %v850, %v849
        %v862 = vunpack.c.l.b16 %v853
        %v863 = vunpack.c.l.b16 %v854
        %v864 = vunpack.c.l.b16 %v855
        %v865 = vunpack.c.l.b16 %v856
        %v866 = vpack.c.b16 %v863, %v862
        %v867 = vpack.c.b16 %v865, %v864
        %vm870 = vcmask 261120
        %v872 = vsel %vm870, %v857, 0
        %874 = vmatprep.subr.bf16.mxu0 0
        %875 = vmatpush1.bf16.msra.mxu0 0
        %876 = vmatprep.subr.bf16.mxu0 0
        %877 = vmatpush1.bf16.msra.mxu0 0
        %878 = vmatprep.subr.bf16.mxu0 0
        %879 = vmatpush1.bf16.msra.mxu0 0
        %880 = vmatprep.subr.bf16.mxu0 0
        %881 = vmatpush1.bf16.msra.mxu0 0
        %882 = vmatprep.subr.bf16.mxu0 0
        %883 = vmatpush1.bf16.msra.mxu0 0
        %884 = vmatprep.subr.bf16.mxu0 0
        %885 = vmatpush1.bf16.msra.mxu0 0
        %886 = vmatprep.subr.bf16.mxu0 0
        %887 = vmatpush1.bf16.msra.mxu0 %v867
        %888 = vmatprep.subr.bf16.mxu0 0
        %889 = vmatpush1.bf16.msra.mxu0 %v866
        %890 = vmatprep.subr.bf16.mxu0 0
        %891 = vmatpush2.bf16.msra.mxu0 0
        %892 = vmatprep.subr.bf16.mxu0 0
        %893 = vmatpush2.bf16.msra.mxu0 0
        %894 = vmatprep.subr.bf16.mxu0 0
        %895 = vmatpush2.bf16.msra.mxu0 0
        %896 = vmatprep.subr.bf16.mxu0 0
        %897 = vmatpush2.bf16.msra.mxu0 0
        %898 = vmatprep.subr.bf16.mxu0 0
        %899 = vmatpush2.bf16.msra.mxu0 0
        %900 = vmatprep.subr.bf16.mxu0 0
        %901 = vmatpush2.bf16.msra.mxu0 0
        %902 = vmatprep.subr.bf16.mxu0 0
        %903 = vmatpush2.bf16.msra.mxu0 0
        %904 = vmatprep.subr.bf16.mxu0 0
        %905 = vmatpush2.bf16.msra.mxu0 0
        %906 = vmatprep.mubr.bf16.mxu0 0
        %907 = vmatmul.mubr.bf16.gmra.mxu0 %v872
        %v908 = vpop.f32.mrf.mxu0
        %v909 = vadd.f32 0.0, %v908
        %v910 = vpop.f32.mrf.mxu0
        %v911 = vpop.f32.mrf.mxu0
        %v912 = vadd.f32 0.0, %v911
        %v913 = vpop.f32.mrf.mxu0
        %914 = vdwg.mxu0
        %v915 = vpack.c.bf16 %v912, %v909
        %v918 = vunpack.c.l.b16 %v851
        %v919 = vunpack.c.l.b16 %v852
        %v920 = vpack.c.b16 %v919, %v918
        %vm921 = vcmask 130048
        %v923 = vsel %vm921, %v920, 0
        %925 = vmatprep.subr.bf16.mxu0 0
        %926 = vmatpush1.bf16.msra.mxu0 0
        %927 = vmatprep.subr.bf16.mxu0 0
        %928 = vmatpush1.bf16.msra.mxu0 0
        %929 = vmatprep.subr.bf16.mxu0 0
        %930 = vmatpush1.bf16.msra.mxu0 0
        %931 = vmatprep.subr.bf16.mxu0 0
        %932 = vmatpush1.bf16.msra.mxu0 0
        %933 = vmatprep.subr.bf16.mxu0 0
        %934 = vmatpush1.bf16.msra.mxu0 0
        %935 = vmatprep.subr.bf16.mxu0 0
        %936 = vmatpush1.bf16.msra.mxu0 0
        %937 = vmatprep.subr.bf16.mxu0 0
        %938 = vmatpush1.bf16.msra.mxu0 0
        %939 = vmatprep.subr.bf16.mxu0 0
        %940 = vmatpush1.bf16.msra.mxu0 %v915
        %941 = vmatprep.subr.bf16.mxu0 0
        %942 = vmatpush2.bf16.msra.mxu0 0
        %943 = vmatprep.subr.bf16.mxu0 0
        %944 = vmatpush2.bf16.msra.mxu0 0
        %945 = vmatprep.subr.bf16.mxu0 0
        %946 = vmatpush2.bf16.msra.mxu0 0
        %947 = vmatprep.subr.bf16.mxu0 0
        %948 = vmatpush2.bf16.msra.mxu0 0
        %949 = vmatprep.subr.bf16.mxu0 0
        %950 = vmatpush2.bf16.msra.mxu0 0
        %951 = vmatprep.subr.bf16.mxu0 0
        %952 = vmatpush2.bf16.msra.mxu0 0
        %953 = vmatprep.subr.bf16.mxu0 0
        %954 = vmatpush2.bf16.msra.mxu0 0
        %955 = vmatprep.subr.bf16.mxu0 0
        %956 = vmatpush2.bf16.msra.mxu0 0
        %957 = vmatprep.mubr.bf16.mxu0 0
        %958 = vmatmul.mubr.bf16.gmra.mxu0 %v923
        %v959 = vpop.f32.mrf.mxu0
        %v960 = vadd.f32 0.0, %v959
        %v961 = vpop.f32.mrf.mxu0
        %v962 = vpop.f32.mrf.mxu0
        %v963 = vadd.f32 0.0, %v962
        %v964 = vpop.f32.mrf.mxu0
        %965 = vdwg.mxu0
        %v966 = vld [vmem:[%s768] sm:$0xf]
        %v967 = vld [vmem:[%s768 + $0x4] sm:$0xf]
        %v968 = vld [vmem:[%s768 + $0x8] sm:$0xf]
        %v969 = vld [vmem:[%s768 + $0xc] sm:$0xf]
        %v974 = vunpack.c.l.b16 %v966
        %v975 = vunpack.c.l.b16 %v967
        %v976 = vunpack.c.l.b16 %v968
        %v977 = vunpack.c.l.b16 %v969
        %v978 = vpack.c.b16 %v975, %v974
        %v979 = vpack.c.b16 %v977, %v976
        %982 = vmatprep.subr.bf16.mxu0 0
        %983 = vmatpush1.bf16.msra.mxu0 0
        %984 = vmatprep.subr.bf16.mxu0 0
        %985 = vmatpush1.bf16.msra.mxu0 0
        %986 = vmatprep.subr.bf16.mxu0 0
        %987 = vmatpush1.bf16.msra.mxu0 0
        %988 = vmatprep.subr.bf16.mxu0 0
        %989 = vmatpush1.bf16.msra.mxu0 0
        %990 = vmatprep.subr.bf16.mxu0 0
        %991 = vmatpush1.bf16.msra.mxu0 0
        %992 = vmatprep.subr.bf16.mxu0 0
        %993 = vmatpush1.bf16.msra.mxu0 0
        %994 = vmatprep.subr.bf16.mxu0 0
        %995 = vmatpush1.bf16.msra.mxu0 %v979
        %996 = vmatprep.subr.bf16.mxu0 0
        %997 = vmatpush1.bf16.msra.mxu0 %v978
        %998 = vmatprep.subr.bf16.mxu0 0
        %999 = vmatpush2.bf16.msra.mxu0 0
        %1000 = vmatprep.subr.bf16.mxu0 0
        %1001 = vmatpush2.bf16.msra.mxu0 0
        %1002 = vmatprep.subr.bf16.mxu0 0
        %1003 = vmatpush2.bf16.msra.mxu0 0
        %1004 = vmatprep.subr.bf16.mxu0 0
        %1005 = vmatpush2.bf16.msra.mxu0 0
        %1006 = vmatprep.subr.bf16.mxu0 0
        %1007 = vmatpush2.bf16.msra.mxu0 0
        %1008 = vmatprep.subr.bf16.mxu0 0
        %1009 = vmatpush2.bf16.msra.mxu0 0
        %1010 = vmatprep.subr.bf16.mxu0 0
        %1011 = vmatpush2.bf16.msra.mxu0 0
        %1012 = vmatprep.subr.bf16.mxu0 0
        %1013 = vmatpush2.bf16.msra.mxu0 0
        %1014 = vmatprep.mubr.bf16.mxu0 0
        %1015 = vmatmul.mubr.bf16.gmra.mxu0 %v872
        %v1016 = vpop.f32.mrf.mxu0
        %v1017 = vadd.f32 %v960, %v1016
        %v1018 = vpop.f32.mrf.mxu0
        %v1019 = vpop.f32.mrf.mxu0
        %v1020 = vadd.f32 %v963, %v1019
        %v1021 = vpop.f32.mrf.mxu0
        %1022 = vdwg.mxu0
        %v1023 = vld [vmem:[%s642] sm:$0x1]
        %v1025 = vlaneseq
        %v1026 = vshrl.u32 %v1025, 7
        %v1027 = vsub.s32 0, %v1026
        %v1028 = vrot.slane %v1023, %v1027
        %v1030 = vadd.f32 %v1017, %v1028
        %v1031 = vadd.f32 %v1020, %v1028
        %v1032 = vmax.f32 %v1030, 0.0
        %v1033 = vmax.f32 %v1031, 0.0
        %s1034 = scalar_lea.vmem %s763, 8
        %v1035 = vld [vmem:[%s1034] sm:$0xf]
        %v1036 = vld [vmem:[%s1034 + $0x4] sm:$0xf]
        %v1037 = vld [vmem:[%s783] sm:$0xf]
        %v1038 = vld [vmem:[%s783 + $0x4] sm:$0xf]
        %v1039 = vld [vmem:[%s783 + $0x8] sm:$0xf]
        %v1040 = vld [vmem:[%s783 + $0xc] sm:$0xf]
        %v1041 = vpack.c.bf16 %v1033, %v1032
        %v1046 = vunpack.c.l.b16 %v1037
        %v1047 = vunpack.c.l.b16 %v1038
        %v1048 = vunpack.c.l.b16 %v1039
        %v1049 = vunpack.c.l.b16 %v1040
        %v1050 = vpack.c.b16 %v1047, %v1046
        %v1051 = vpack.c.b16 %v1049, %v1048
        %v1055 = vsel %vm870, %v1041, 0
        %1057 = vmatprep.subr.bf16.mxu0 0
        %1058 = vmatpush1.bf16.msra.mxu0 0
        %1059 = vmatprep.subr.bf16.mxu0 0
        %1060 = vmatpush1.bf16.msra.mxu0 0
        %1061 = vmatprep.subr.bf16.mxu0 0
        %1062 = vmatpush1.bf16.msra.mxu0 0
        %1063 = vmatprep.subr.bf16.mxu0 0
        %1064 = vmatpush1.bf16.msra.mxu0 0
        %1065 = vmatprep.subr.bf16.mxu0 0
        %1066 = vmatpush1.bf16.msra.mxu0 0
        %1067 = vmatprep.subr.bf16.mxu0 0
        %1068 = vmatpush1.bf16.msra.mxu0 0
        %1069 = vmatprep.subr.bf16.mxu0 0
        %1070 = vmatpush1.bf16.msra.mxu0 %v1051
        %1071 = vmatprep.subr.bf16.mxu0 0
        %1072 = vmatpush1.bf16.msra.mxu0 %v1050
        %1073 = vmatprep.subr.bf16.mxu0 0
        %1074 = vmatpush2.bf16.msra.mxu0 0
        %1075 = vmatprep.subr.bf16.mxu0 0
        %1076 = vmatpush2.bf16.msra.mxu0 0
        %1077 = vmatprep.subr.bf16.mxu0 0
        %1078 = vmatpush2.bf16.msra.mxu0 0
        %1079 = vmatprep.subr.bf16.mxu0 0
        %1080 = vmatpush2.bf16.msra.mxu0 0
        %1081 = vmatprep.subr.bf16.mxu0 0
        %1082 = vmatpush2.bf16.msra.mxu0 0
        %1083 = vmatprep.subr.bf16.mxu0 0
        %1084 = vmatpush2.bf16.msra.mxu0 0
        %1085 = vmatprep.subr.bf16.mxu0 0
        %1086 = vmatpush2.bf16.msra.mxu0 0
        %1087 = vmatprep.subr.bf16.mxu0 0
        %1088 = vmatpush2.bf16.msra.mxu0 0
        %1089 = vmatprep.mubr.bf16.mxu0 0
        %1090 = vmatmul.mubr.bf16.gmra.mxu0 %v1055
        %v1091 = vpop.f32.mrf.mxu0
        %v1092 = vadd.f32 0.0, %v1091
        %v1093 = vpop.f32.mrf.mxu0
        %v1094 = vpop.f32.mrf.mxu0
        %v1095 = vadd.f32 0.0, %v1094
        %v1096 = vpop.f32.mrf.mxu0
        %1097 = vdwg.mxu0
        %v1098 = vpack.c.bf16 %v1095, %v1092
        %v1101 = vunpack.c.l.b16 %v1035
        %v1102 = vunpack.c.l.b16 %v1036
        %v1103 = vpack.c.b16 %v1102, %v1101
        %v1105 = vsel %vm921, %v1103, 0
        %1107 = vmatprep.subr.bf16.mxu0 0
        %1108 = vmatpush1.bf16.msra.mxu0 0
        %1109 = vmatprep.subr.bf16.mxu0 0
        %1110 = vmatpush1.bf16.msra.mxu0 0
        %1111 = vmatprep.subr.bf16.mxu0 0
        %1112 = vmatpush1.bf16.msra.mxu0 0
        %1113 = vmatprep.subr.bf16.mxu0 0
        %1114 = vmatpush1.bf16.msra.mxu0 0
        %1115 = vmatprep.subr.bf16.mxu0 0
        %1116 = vmatpush1.bf16.msra.mxu0 0
        %1117 = vmatprep.subr.bf16.mxu0 0
        %1118 = vmatpush1.bf16.msra.mxu0 0
        %1119 = vmatprep.subr.bf16.mxu0 0
        %1120 = vmatpush1.bf16.msra.mxu0 0
        %1121 = vmatprep.subr.bf16.mxu0 0
        %1122 = vmatpush1.bf16.msra.mxu0 %v1098
        %1123 = vmatprep.subr.bf16.mxu0 0
        %1124 = vmatpush2.bf16.msra.mxu0 0
        %1125 = vmatprep.subr.bf16.mxu0 0
        %1126 = vmatpush2.bf16.msra.mxu0 0
        %1127 = vmatprep.subr.bf16.mxu0 0
        %1128 = vmatpush2.bf16.msra.mxu0 0
        %1129 = vmatprep.subr.bf16.mxu0 0
        %1130 = vmatpush2.bf16.msra.mxu0 0
        %1131 = vmatprep.subr.bf16.mxu0 0
        %1132 = vmatpush2.bf16.msra.mxu0 0
        %1133 = vmatprep.subr.bf16.mxu0 0
        %1134 = vmatpush2.bf16.msra.mxu0 0
        %1135 = vmatprep.subr.bf16.mxu0 0
        %1136 = vmatpush2.bf16.msra.mxu0 0
        %1137 = vmatprep.subr.bf16.mxu0 0
        %1138 = vmatpush2.bf16.msra.mxu0 0
        %1139 = vmatprep.mubr.bf16.mxu0 0
        %1140 = vmatmul.mubr.bf16.gmra.mxu0 %v1105
        %v1141 = vpop.f32.mrf.mxu0
        %v1142 = vadd.f32 0.0, %v1141
        %v1143 = vpop.f32.mrf.mxu0
        %v1144 = vpop.f32.mrf.mxu0
        %v1145 = vadd.f32 0.0, %v1144
        %v1146 = vpop.f32.mrf.mxu0
        %1147 = vdwg.mxu0
        %v1148 = vld [vmem:[%s778] sm:$0xf]
        %v1149 = vld [vmem:[%s778 + $0x4] sm:$0xf]
        %v1150 = vld [vmem:[%s778 + $0x8] sm:$0xf]
        %v1151 = vld [vmem:[%s778 + $0xc] sm:$0xf]
        %v1156 = vunpack.c.l.b16 %v1148
        %v1157 = vunpack.c.l.b16 %v1149
        %v1158 = vunpack.c.l.b16 %v1150
        %v1159 = vunpack.c.l.b16 %v1151
        %v1160 = vpack.c.b16 %v1157, %v1156
        %v1161 = vpack.c.b16 %v1159, %v1158
        %1164 = vmatprep.subr.bf16.mxu0 0
        %1165 = vmatpush1.bf16.msra.mxu0 0
        %1166 = vmatprep.subr.bf16.mxu0 0
        %1167 = vmatpush1.bf16.msra.mxu0 0
        %1168 = vmatprep.subr.bf16.mxu0 0
        %1169 = vmatpush1.bf16.msra.mxu0 0
        %1170 = vmatprep.subr.bf16.mxu0 0
        %1171 = vmatpush1.bf16.msra.mxu0 0
        %1172 = vmatprep.subr.bf16.mxu0 0
        %1173 = vmatpush1.bf16.msra.mxu0 0
        %1174 = vmatprep.subr.bf16.mxu0 0
        %1175 = vmatpush1.bf16.msra.mxu0 0
        %1176 = vmatprep.subr.bf16.mxu0 0
        %1177 = vmatpush1.bf16.msra.mxu0 %v1161
        %1178 = vmatprep.subr.bf16.mxu0 0
        %1179 = vmatpush1.bf16.msra.mxu0 %v1160
        %1180 = vmatprep.subr.bf16.mxu0 0
        %1181 = vmatpush2.bf16.msra.mxu0 0
        %1182 = vmatprep.subr.bf16.mxu0 0
        %1183 = vmatpush2.bf16.msra.mxu0 0
        %1184 = vmatprep.subr.bf16.mxu0 0
        %1185 = vmatpush2.bf16.msra.mxu0 0
        %1186 = vmatprep.subr.bf16.mxu0 0
        %1187 = vmatpush2.bf16.msra.mxu0 0
        %1188 = vmatprep.subr.bf16.mxu0 0
        %1189 = vmatpush2.bf16.msra.mxu0 0
        %1190 = vmatprep.subr.bf16.mxu0 0
        %1191 = vmatpush2.bf16.msra.mxu0 0
        %1192 = vmatprep.subr.bf16.mxu0 0
        %1193 = vmatpush2.bf16.msra.mxu0 0
        %1194 = vmatprep.subr.bf16.mxu0 0
        %1195 = vmatpush2.bf16.msra.mxu0 0
        %1196 = vmatprep.mubr.bf16.mxu0 0
        %1197 = vmatmul.mubr.bf16.gmra.mxu0 %v1055
        %v1198 = vpop.f32.mrf.mxu0
        %v1199 = vadd.f32 %v1142, %v1198
        %v1200 = vpop.f32.mrf.mxu0
        %v1201 = vpop.f32.mrf.mxu0
        %v1202 = vadd.f32 %v1145, %v1201
        %v1203 = vpop.f32.mrf.mxu0
        %1204 = vdwg.mxu0
        %v1205 = vld [vmem:[%s650] sm:$0x1]
        %v1207 = vlaneseq
        %v1208 = vshrl.u32 %v1207, 7
        %v1209 = vsub.s32 0, %v1208
        %v1210 = vrot.slane %v1205, %v1209
        %v1212 = vadd.f32 %v1199, %v1210
        %v1213 = vadd.f32 %v1202, %v1210
        %p1214 = scmp.eq.s32.totalorder %s37, 0
        // Predicated region
        $region117: #{biclassifier_pos_forward.1} parent=79 // pred_check
          %p1215 = pneg %p1214
        $region118: #{biclassifier_pos_forward.1} parent=79 // pred_check_branch
          %1217 = sbr.rel (%p1215) target = $region120
        $region119: #{biclassifier_pos_forward.1} parent=79 // pred_region
          %v1218 = vpack.c.bf16 %v1213, %v1212
          %v1220 = vunpack.c.l.b16 %v1218
          %v1221 = vunpack.c.h.b16 %v1218
          %v1222 = vpack.c.b16 %v1220, %v1220
          %v1223 = vpack.c.b16 %v1221, %v1221
          %vm1226 = vcmask 125952
          %1227 = vst.msk [vmem:[#allocation2] sm:$0xf] %vm1226, %v1222
          %1228 = vst.msk [vmem:[#allocation2 + $0x4] sm:$0xf] %vm1226, %v1223
        $region120: #{biclassifier_pos_forward.1} parent=79 // pred_fallthru
          _
        %p1229 = scmp.eq.s32.totalorder %s37, 1
        // Predicated region
        $region121: #{biclassifier_pos_forward.1} parent=79 // pred_check
          %p1230 = pneg %p1229
        $region122: #{biclassifier_pos_forward.1} parent=79 // pred_check_branch
          %1232 = sbr.rel (%p1230) target = $region124
        $region123: #{biclassifier_pos_forward.1} parent=79 // pred_region
          %v1233 = vld [vmem:[#allocation2] sm:$0xf]
          %v1234 = vld [vmem:[#allocation2 + $0x4] sm:$0xf]
          %v1235 = vmax.bf16 %v1233, 0
          %v1236 = vmax.bf16 %v1234, 0
          %v1237 = vmax.f32 %v1212, 0.0
          %v1238 = vmax.f32 %v1213, 0.0
          %v1239 = vld [vmem:[#allocation10] sm:$0xf]
          %v1240 = vld [vmem:[#allocation10 + $0x4] sm:$0xf]
          %v1241 = vld [vmem:[#allocation11] sm:$0xf]
          %v1242 = vld [vmem:[#allocation11 + $0x4] sm:$0xf]
          %v1243 = vpack.c.bf16 %v1238, %v1237
          %v1246 = vunpack.c.l.b16 %v1241
          %v1247 = vunpack.c.l.b16 %v1242
          %v1248 = vpack.c.b16 %v1247, %v1246
          %v1251 = vsel %vm921, %v1243, 0
          %1253 = vmatprep.subr.bf16.mxu0 0
          %1254 = vmatpush1.bf16.msra.mxu0 0
          %1255 = vmatprep.subr.bf16.mxu0 0
          %1256 = vmatpush1.bf16.msra.mxu0 0
          %1257 = vmatprep.subr.bf16.mxu0 0
          %1258 = vmatpush1.bf16.msra.mxu0 0
          %1259 = vmatprep.subr.bf16.mxu0 0
          %1260 = vmatpush1.bf16.msra.mxu0 0
          %1261 = vmatprep.subr.bf16.mxu0 0
          %1262 = vmatpush1.bf16.msra.mxu0 0
          %1263 = vmatprep.subr.bf16.mxu0 0
          %1264 = vmatpush1.bf16.msra.mxu0 0
          %1265 = vmatprep.subr.bf16.mxu0 0
          %1266 = vmatpush1.bf16.msra.mxu0 0
          %1267 = vmatprep.subr.bf16.mxu0 0
          %1268 = vmatpush1.bf16.msra.mxu0 %v1248
          %1269 = vmatprep.subr.bf16.mxu0 0
          %1270 = vmatpush2.bf16.msra.mxu0 0
          %1271 = vmatprep.subr.bf16.mxu0 0
          %1272 = vmatpush2.bf16.msra.mxu0 0
          %1273 = vmatprep.subr.bf16.mxu0 0
          %1274 = vmatpush2.bf16.msra.mxu0 0
          %1275 = vmatprep.subr.bf16.mxu0 0
          %1276 = vmatpush2.bf16.msra.mxu0 0
          %1277 = vmatprep.subr.bf16.mxu0 0
          %1278 = vmatpush2.bf16.msra.mxu0 0
          %1279 = vmatprep.subr.bf16.mxu0 0
          %1280 = vmatpush2.bf16.msra.mxu0 0
          %1281 = vmatprep.subr.bf16.mxu0 0
          %1282 = vmatpush2.bf16.msra.mxu0 0
          %1283 = vmatprep.subr.bf16.mxu0 0
          %1284 = vmatpush2.bf16.msra.mxu0 0
          %1285 = vmatprep.mubr.bf16.mxu0 0
          %1286 = vmatmul.mubr.bf16.gmra.mxu0 %v1251
          %v1287 = vpop.f32.mrf.mxu0
          %v1288 = vadd.f32 0.0, %v1287
          %v1289 = vpop.f32.mrf.mxu0
          %v1290 = vpop.f32.mrf.mxu0
          %v1291 = vadd.f32 0.0, %v1290
          %v1292 = vpop.f32.mrf.mxu0
          %1293 = vdwg.mxu0
          %v1296 = vunpack.c.l.b16 %v1235
          %v1297 = vunpack.c.l.b16 %v1236
          %v1298 = vpack.c.b16 %v1297, %v1296
          %v1301 = vunpack.c.l.b16 %v1239
          %v1302 = vunpack.c.l.b16 %v1240
          %v1303 = vpack.c.b16 %v1302, %v1301
          %v1306 = vsel %vm921, %v1298, 0
          %1308 = vmatprep.subr.bf16.mxu0 0
          %1309 = vmatpush1.bf16.msra.mxu0 0
          %1310 = vmatprep.subr.bf16.mxu0 0
          %1311 = vmatpush1.bf16.msra.mxu0 0
          %1312 = vmatprep.subr.bf16.mxu0 0
          %1313 = vmatpush1.bf16.msra.mxu0 0
          %1314 = vmatprep.subr.bf16.mxu0 0
          %1315 = vmatpush1.bf16.msra.mxu0 0
          %1316 = vmatprep.subr.bf16.mxu0 0
          %1317 = vmatpush1.bf16.msra.mxu0 0
          %1318 = vmatprep.subr.bf16.mxu0 0
          %1319 = vmatpush1.bf16.msra.mxu0 0
          %1320 = vmatprep.subr.bf16.mxu0 0
          %1321 = vmatpush1.bf16.msra.mxu0 0
          %1322 = vmatprep.subr.bf16.mxu0 0
          %1323 = vmatpush1.bf16.msra.mxu0 %v1303
          %1324 = vmatprep.subr.bf16.mxu0 0
          %1325 = vmatpush2.bf16.msra.mxu0 0
          %1326 = vmatprep.subr.bf16.mxu0 0
          %1327 = vmatpush2.bf16.msra.mxu0 0
          %1328 = vmatprep.subr.bf16.mxu0 0
          %1329 = vmatpush2.bf16.msra.mxu0 0
          %1330 = vmatprep.subr.bf16.mxu0 0
          %1331 = vmatpush2.bf16.msra.mxu0 0
          %1332 = vmatprep.subr.bf16.mxu0 0
          %1333 = vmatpush2.bf16.msra.mxu0 0
          %1334 = vmatprep.subr.bf16.mxu0 0
          %1335 = vmatpush2.bf16.msra.mxu0 0
          %1336 = vmatprep.subr.bf16.mxu0 0
          %1337 = vmatpush2.bf16.msra.mxu0 0
          %1338 = vmatprep.subr.bf16.mxu0 0
          %1339 = vmatpush2.bf16.msra.mxu0 0
          %1340 = vmatprep.mubr.bf16.mxu0 0
          %1341 = vmatmul.mubr.bf16.gmra.mxu0 %v1306
          %v1342 = vpop.f32.mrf.mxu0
          %v1343 = vadd.f32 %v1288, %v1342
          %v1344 = vpop.f32.mrf.mxu0
          %v1345 = vpop.f32.mrf.mxu0
          %v1346 = vadd.f32 %v1291, %v1345
          %v1347 = vpop.f32.mrf.mxu0
          %1348 = vdwg.mxu0
          %v1349 = vld [vmem:[#allocation13] sm:$0x1]
          %v1351 = vlaneseq
          %v1352 = vshrl.u32 %v1351, 7
          %v1353 = vsub.s32 0, %v1352
          %v1354 = vrot.slane %v1349, %v1353
          %v1356 = vadd.f32 %v1343, %v1354
          %v1357 = vadd.f32 %v1346, %v1354
          %v1358 = vld [vmem:[#allocation14] sm:$0xf]
          %v1359 = vld [vmem:[#allocation14 + $0x4] sm:$0xf]
          %v1360 = vld [vmem:[#allocation14 + $0x8] sm:$0xf]
          %v1361 = vld [vmem:[#allocation14 + $0xc] sm:$0xf]
          %v1362 = vpack.c.bf16 %v1357, %v1356
          %v1363 = vld [vmem:[#allocation16] sm:$0x1]
          %v1365 = vlaneseq
          %v1366 = vshrl.u32 %v1365, 7
          %v1367 = vsub.s32 0, %v1366
          %v1368 = vrot.slane %v1363, %v1367
          %v1374 = vunpack.c.l.b16 %v1358
          %v1375 = vunpack.c.l.b16 %v1359
          %v1376 = vunpack.c.l.b16 %v1360
          %v1377 = vunpack.c.l.b16 %v1361
          %v1378 = vpack.c.b16 %v1375, %v1374
          %v1379 = vpack.c.b16 %v1377, %v1376
          %v1383 = vsel %vm870, %v1362, 0
          %1385 = vmatprep.subr.bf16.mxu0 0
          %1386 = vmatpush1.bf16.msra.mxu0 0
          %1387 = vmatprep.subr.bf16.mxu0 0
          %1388 = vmatpush1.bf16.msra.mxu0 0
          %1389 = vmatprep.subr.bf16.mxu0 0
          %1390 = vmatpush1.bf16.msra.mxu0 0
          %1391 = vmatprep.subr.bf16.mxu0 0
          %1392 = vmatpush1.bf16.msra.mxu0 0
          %1393 = vmatprep.subr.bf16.mxu0 0
          %1394 = vmatpush1.bf16.msra.mxu0 0
          %1395 = vmatprep.subr.bf16.mxu0 0
          %1396 = vmatpush1.bf16.msra.mxu0 0
          %1397 = vmatprep.subr.bf16.mxu0 0
          %1398 = vmatpush1.bf16.msra.mxu0 %v1379
          %1399 = vmatprep.subr.bf16.mxu0 0
          %1400 = vmatpush1.bf16.msra.mxu0 %v1378
          %1401 = vmatprep.subr.bf16.mxu0 0
          %1402 = vmatpush2.bf16.msra.mxu0 0
          %1403 = vmatprep.subr.bf16.mxu0 0
          %1404 = vmatpush2.bf16.msra.mxu0 0
          %1405 = vmatprep.subr.bf16.mxu0 0
          %1406 = vmatpush2.bf16.msra.mxu0 0
          %1407 = vmatprep.subr.bf16.mxu0 0
          %1408 = vmatpush2.bf16.msra.mxu0 0
          %1409 = vmatprep.subr.bf16.mxu0 0
          %1410 = vmatpush2.bf16.msra.mxu0 0
          %1411 = vmatprep.subr.bf16.mxu0 0
          %1412 = vmatpush2.bf16.msra.mxu0 0
          %1413 = vmatprep.subr.bf16.mxu0 0
          %1414 = vmatpush2.bf16.msra.mxu0 0
          %1415 = vmatprep.subr.bf16.mxu0 0
          %1416 = vmatpush2.bf16.msra.mxu0 0
          %1417 = vmatprep.mubr.bf16.mxu0 0
          %1418 = vmatmul.mubr.bf16.gmra.mxu0 %v1383
          %v1419 = vpop.f32.mrf.mxu0
          %v1420 = vadd.f32 %v1368, %v1419
          %v1421 = vpop.f32.mrf.mxu0
          %v1422 = vpop.f32.mrf.mxu0
          %v1423 = vadd.f32 %v1368, %v1422
          %v1424 = vpop.f32.mrf.mxu0
          %1425 = vdwg.mxu0
          %1426 = vst [vmem:[%s15] sm:$0xff] %v1420
          %1427 = vst [vmem:[%s15 + $0x8] sm:$0xff] %v1423
        $region124: #{biclassifier_pos_forward.1} parent=79 // pred_fallthru
          _
        // Predicated region
        $region125: #{biclassifier_pos_forward.1} parent=79 // pred_check
          %p1428 = pneg %p415
        $region126: #{biclassifier_pos_forward.1} parent=79 // pred_check_branch
          %1430 = sbr.rel (%p1428) target = $region128
        $region127: #{biclassifier_pos_forward.1} parent=79 // pred_region
          _
        $region128: #{biclassifier_pos_forward.1} parent=79 // pred_fallthru
          _
        // Predicated region
        $region129: #{biclassifier_pos_forward.1} parent=79 // pred_check
          %p1431 = pneg %p415
        $region130: #{biclassifier_pos_forward.1} parent=79 // pred_check_branch
          %1433 = sbr.rel (%p1431) target = $region132
        $region131: #{biclassifier_pos_forward.1} parent=79 // pred_region
          _
        $region132: #{biclassifier_pos_forward.1} parent=79 // pred_fallthru
          _
      $region80: #{biclassifier_pos_forward.1} parent=5 // pred_fallthru
        _
      %p1434 = scmp.le.s32.totalorder 2, %s32
      // Predicated region
      $region133: #{biclassifier_pos_forward.1} parent=5 // pred_check
        %p1435 = pneg %p1434
      $region134: #{biclassifier_pos_forward.1} parent=5 // pred_check_branch
        %1437 = sbr.rel (%p1435) target = $region136
      $region135: #{biclassifier_pos_forward.1} parent=5 // pred_region
        %s1438 = ssub.s32 %s32, 2
      $region136: #{biclassifier_pos_forward.1} parent=5 // pred_fallthru
        _
    $region6: #{biclassifier_pos_forward.1} parent=1 // loop_footer
      %s36 = sadd.s32 1, %s32
    $region7: #{biclassifier_pos_forward.1} parent=1 // loop_footer_branch
      %31 = sbr.rel target = $region3
    $region8: #{biclassifier_pos_forward.1} parent=1 // loop_exit
      _
    %1439 = vsyncpa [#allocation4], 1
    %s1440 = scalar_lea.sflag [#allocation4], 1
    %1441 = vsyncpa %s1440, 1
    %1442 = vsyncpa [#allocation6], 1
    %s1443 = scalar_lea.sflag [#allocation6], 1
    %1444 = vsyncpa %s1443, 1
    %1445 = vsyncpa [#allocation9], 1
    %s1446 = scalar_lea.sflag [#allocation9], 1
    %1447 = vsyncpa %s1446, 1
    %1448 = vsyncpa [#allocation12], 1
    %1449 = vsyncpa [#allocation15], 1

</llo_original>
